<compile_context>
chip_gen: v7x
topology: tpu7x:2x2x1
jax: 0.10.0
libtpu: 0.0.40
codegen_flags: <defaults>
</compile_context>

<pallas_src>
import functools

import numpy as np
import jax
import jax.numpy as jnp
from jax.experimental import pallas as pl
from jax.experimental.pallas import tpu as pltpu


def _angular_offsets(angular, height, width, td_factor):
    """Per-angular-view constant normalized flow offsets (same loop order as torch)."""
    factor_h = td_factor * (-1.0 / height)
    factor_w = td_factor * (-1.0 / width)
    ks, ls = [], []
    for k in range(-angular // 2 + 1, angular // 2 + 1):
        for l in range(-angular // 2 + 1, angular // 2 + 1):
            ks.append(k)
            ls.append(l)
    dx = jnp.asarray(np.asarray(ls, np.float32) * np.float32(factor_w))  # (A,)
    dy = jnp.asarray(np.asarray(ks, np.float32) * np.float32(factor_h))  # (A,)
    return dx, dy


def _interp_matrices(shift, size, *, transposed):
    """Bilinear sampling matrices for constant pixel shifts.

    Matches F.grid_sample(mode='bilinear', padding_mode='border',
    align_corners=True) for an identity grid plus a constant offset of `shift`
    pixels along this axis.

    transposed=False -> M[..., out, src]; transposed=True -> M[..., src, out]
    (the width matrices are emitted pre-transposed so the kernel can right-multiply
    without any wrapper- or kernel-side transpose).
    """
    out_idx = jnp.arange(size, dtype=jnp.float32)                        # (out,)
    coord = jnp.clip(shift[..., None] + out_idx, 0.0, float(size - 1))   # (..., out)
    lo = jnp.floor(coord)
    frac = coord - lo                                                     # (..., out)
    lo_i = lo.astype(jnp.int32)
    src_i = jnp.arange(size, dtype=jnp.int32)                             # (src,)
    if transposed:
        hit_lo = (src_i[:, None] == lo_i[..., None, :]).astype(jnp.float32)
        hit_hi = (src_i[:, None] == lo_i[..., None, :] + 1).astype(jnp.float32)
        return (1.0 - frac)[..., None, :] * hit_lo + frac[..., None, :] * hit_hi
    hit_lo = (src_i == lo_i[..., None]).astype(jnp.float32)
    hit_hi = (src_i == lo_i[..., None] + 1).astype(jnp.float32)
    return (1.0 - frac)[..., None] * hit_lo + frac[..., None] * hit_hi


def _shift_matrices(planes, dx, dy, height, width):
    """axT: (N, L, A, W_src, W_out) width matrices (pre-transposed),
       ay : (N, L, A, H_out, H_src) height matrices."""
    planes_f = planes.astype(jnp.float32)
    sx = planes_f[:, :, None] * dx[None, None, :] * ((width - 1) * 0.5)   # (N, L, A)
    sy = planes_f[:, :, None] * dy[None, None, :] * ((height - 1) * 0.5)  # (N, L, A)
    axT = _interp_matrices(sx, width, transposed=True)
    ay = _interp_matrices(sy, height, transposed=False)
    return axT, ay


def _multilayer_kernel(lr_ref, axT_ref, ay_ref, out_ref, *, L, R, C, H, Wp, op_dtype):
    # lr_ref : (1, L, R*C*H, Wp)   per-sample low-rank images (rank*chan merged in rows)
    # axT_ref: (1, L, 1, Wp, Wp)   width interpolation matrix for this angular view
    # ay_ref : (1, L, 1, H, H)     height interpolation matrix for this angular view
    # out_ref: (1, 1, C, H, Wp)
    RC = R * C
    prods = [None] * RC                      # running per-(rank,chan) product over layers
    for l in range(L):                       # static unrolled loop over layers
        img = lr_ref[0, l]                   # (RC*H, Wp)
        axT = axT_ref[0, l, 0]               # (Wp, Wp)  (src, out)
        ay = ay_ref[0, l, 0]                 # (H, H)    (out, src)
        # width pass (MXU): t1[., x] = sum_s img[., s] * Ax[x, s]
        t1 = jnp.dot(img, axT, preferred_element_type=jnp.float32)       # (RC*H, Wp) f32
        t1 = t1.astype(op_dtype)
        # height pass (MXU): per (rank,chan) slab, samp[y, x] = sum_k Ay[y, k] t1[k, x]
        # (unrolled dots instead of a broadcast_to + batched einsum)
        for rc in range(RC):
            s = jnp.dot(ay, t1[rc * H:(rc + 1) * H, :],
                        preferred_element_type=jnp.float32)              # (H, Wp) f32
            prods[rc] = s if prods[rc] is None else prods[rc] * s
    # mean over the rank dimension (reduce_mean=True path); rc = r*C + c
    inv_r = jnp.float32(1.0 / R)
    for c in range(C):
        acc = prods[c]
        for r in range(1, R):
            acc = acc + prods[r * C + c]
        out_ref[0, 0, c] = acc * inv_r                                    # (H, Wp)


def multilayer_forward(low_rank, planes, *, height, width, angular, td_factor,
                       operand_dtype=jnp.float32):
    """JAX/Pallas equivalent of multilayer.forward with reduce_mean=True.

    low_rank: (N, L, R, C, H, W) float32, planes: (N, L) float32
    returns : (N, angular**2, C, H, W) float32

    operand_dtype=jnp.bfloat16 feeds the MXU bf16 operands (f32 accumulation) for
    2-4x matmul throughput at a small quantization cost on low_rank.
    """
    N, L, R, C, H, W = low_rank.shape
    assert (H, W) == (height, width)
    assert H % 8 == 0, "H must be a multiple of 8 for the in-kernel row-block slices"
    A = angular * angular
    RC = R * C

    dx, dy = _angular_offsets(angular, height, width, td_factor)
    axT, ay = _shift_matrices(planes, dx, dy, height, width)

    lr = low_rank.astype(jnp.float32).reshape(N, L, RC * H, W)

    # Lane padding: keep the last (lane) dim >= 128 so stores are unmasked and the
    # width matmul is lane-dense.  Zero padding is exact: padded columns stay zero
    # through both passes and are sliced off below.
    W_pad = W if W >= 128 else 128
    if W_pad != W:
        lr = jnp.pad(lr, ((0, 0), (0, 0), (0, 0), (0, W_pad - W)))
        axT = jnp.pad(axT, ((0, 0), (0, 0), (0, 0), (0, W_pad - W), (0, W_pad - W)))

    lr = lr.astype(operand_dtype)
    axT = axT.astype(operand_dtype)
    ay_m = ay.astype(operand_dtype)

    # Explicit VMEM budget: double-buffered blocks + headroom, capped at 48 MiB so it
    # stays under v7x's 64 MiB physical VMEM (plenty on v5e/v6e's 128 MiB).
    itemsize = int(np.dtype(operand_dtype).itemsize)
    block_bytes = (2 * (L * RC * H * W_pad + L * W_pad * W_pad + L * H * H) * itemsize
                   + 2 * C * H * W_pad * 4)
    vmem_limit = int(min(48 * 2 ** 20, max(32 * 2 ** 20, 3 * block_bytes)))
    # NOTE: if blocks ever outgrow this (huge H, W), add a C grid axis to tile channels.

    flops = 2 * N * A * L * RC * H * W_pad * (W_pad + H)
    bytes_accessed = int((lr.size + axT.size + ay_m.size) * itemsize
                         + N * A * C * H * W_pad * 4)
    cost = pl.CostEstimate(flops=int(flops), transcendentals=0,
                           bytes_accessed=bytes_accessed)

    kernel = functools.partial(_multilayer_kernel, L=L, R=R, C=C, H=H, Wp=W_pad,
                               op_dtype=operand_dtype)

    out = pl.pallas_call(
        kernel,
        out_shape=jax.ShapeDtypeStruct((N, A, C, H, W_pad), jnp.float32),
        grid_spec=pltpu.PrefetchScalarGridSpec(
            num_scalar_prefetch=0,
            grid=(N, A),
            in_specs=[
                # low_rank block index is independent of `a`: Pallas skips the re-DMA
                # across consecutive angular views of the same sample.
                pl.BlockSpec((1, L, RC * H, W_pad), lambda n, a: (n, 0, 0, 0)),
                pl.BlockSpec((1, L, 1, W_pad, W_pad), lambda n, a: (n, 0, a, 0, 0)),
                pl.BlockSpec((1, L, 1, H, H), lambda n, a: (n, 0, a, 0, 0)),
            ],
            out_specs=pl.BlockSpec((1, 1, C, H, W_pad), lambda n, a: (n, a, 0, 0, 0)),
        ),
        compiler_params=pltpu.CompilerParams(
            dimension_semantics=("parallel", "parallel"),
            vmem_limit_bytes=vmem_limit),
        cost_estimate=cost,
    )(lr, axT, ay_m)

    if W_pad != W:
        out = out[..., :W]
    return out


def _reference(low_rank, planes, *, height, width, angular, td_factor):
    """Pure-JAX reference using the same separable-shift math (different contraction path)."""
    dx, dy = _angular_offsets(angular, height, width, td_factor)
    axT, ay = _shift_matrices(planes, dx, dy, height, width)  # (N,L,A,W,W), (N,L,A,H,H)
    lr = low_rank.astype(jnp.float32)
    t = jnp.einsum("nlasw,nlrcis->nlarciw", axT, lr, precision="highest")
    s = jnp.einsum("nlahi,nlarciw->nlarchw", ay, t, precision="highest")
    prod = jnp.prod(s, axis=1)           # product over layers -> (N, A, R, C, H, W)
    return prod.mean(axis=2)             # mean over rank      -> (N, A, C, H, W)


if __name__ == "__main__":
    # hyperparams implied by the module's __init__ (args.num_layers, args.angular, args.td_factor)
    N, L, R, C, H, W = 2, 2, 2, 3, 16, 16
    angular = 3
    td_factor = 1.0

    key = jax.random.PRNGKey(0)
    k1, k2 = jax.random.split(key)
    low_rank = jax.random.normal(k1, (N, L, R, C, H, W), dtype=jnp.float32)
    planes = jax.random.uniform(k2, (N, L), dtype=jnp.float32, minval=0.5, maxval=2.0)

    ref = _reference(low_rank, planes, height=H, width=W,
                     angular=angular, td_factor=td_factor)

    # f32 path (semantics-faithful): tight tolerance vs. the pure-JAX reference.
    fwd = jax.jit(functools.partial(multilayer_forward, height=H, width=W,
                                    angular=angular, td_factor=td_factor))
    out = jax.block_until_ready(fwd(low_rank, planes))
    assert out.shape == (N, angular * angular, C, H, W)
    assert bool(jnp.all(jnp.isfinite(out)))
    max_err = float(jnp.max(jnp.abs(out - ref)))
    assert max_err < 1e-3, f"f32 mismatch vs reference: max abs err = {max_err}"

    # bf16-operand path (perf option): loose tolerance (quantizes low_rank / weights).
    fwd_bf16 = jax.jit(functools.partial(multilayer_forward, height=H, width=W,
                                         angular=angular, td_factor=td_factor,
                                         operand_dtype=jnp.bfloat16))
    out_bf16 = jax.block_until_ready(fwd_bf16(low_rank, planes))
    assert bool(jnp.all(jnp.isfinite(out_bf16)))
    max_err_bf16 = float(jnp.max(jnp.abs(out_bf16 - ref)))
    assert max_err_bf16 < 2.5e-1, f"bf16 mismatch vs reference: max abs err = {max_err_bf16}"

    print("KERNEL_OK")
</pallas_src>

<mosaic_0001>
module attributes {stable_mosaic.version = 11 : i64} {
  func.func @_multilayer_kernel(%arg0: i32, %arg1: i32, %arg2: memref<1x2x96x128xf32, #tpu.memory_space<vmem>>, %arg3: memref<1x2x1x128x128xf32, #tpu.memory_space<vmem>>, %arg4: memref<1x2x1x16x16xf32, #tpu.memory_space<vmem>>, %arg5: memref<1x1x3x16x128xf32, #tpu.memory_space<vmem>>) attributes {dimension_semantics = [#tpu.dimension_semantics<parallel>, #tpu.dimension_semantics<parallel>], iteration_bounds = array<i64: 2, 9>, scalar_prefetch = 0 : i64, scratch_operands = 0 : i64, tpu.core_type = #tpu.core_type<tc>, window_params = [{transform_indices = @transform_0, window_bounds = array<i64: 1, 2, 96, 128>}, {transform_indices = @transform_1, window_bounds = array<i64: 1, 2, 1, 128, 128>}, {transform_indices = @transform_2, window_bounds = array<i64: 1, 2, 1, 16, 16>}, {transform_indices = @transform_3, window_bounds = array<i64: 1, 1, 3, 16, 128>}]} {
    %c0 = arith.constant 0 : index
    %c0_0 = arith.constant 0 : index
    %c0_1 = arith.constant 0 : index
    %c0_2 = arith.constant 0 : index
    %0 = vector.load %arg2[%c0, %c0_0, %c0_1, %c0_2] : memref<1x2x96x128xf32, #tpu.memory_space<vmem>>, vector<1x1x96x128xf32>
    %1 = vector.shape_cast %0 : vector<1x1x96x128xf32> to vector<96x128xf32>
    %c0_3 = arith.constant 0 : index
    %c0_4 = arith.constant 0 : index
    %c0_5 = arith.constant 0 : index
    %c0_6 = arith.constant 0 : index
    %c0_7 = arith.constant 0 : index
    %2 = vector.load %arg3[%c0_3, %c0_4, %c0_5, %c0_6, %c0_7] : memref<1x2x1x128x128xf32, #tpu.memory_space<vmem>>, vector<1x1x1x128x128xf32>
    %3 = vector.shape_cast %2 : vector<1x1x1x128x128xf32> to vector<128x128xf32>
    %c0_8 = arith.constant 0 : index
    %c0_9 = arith.constant 0 : index
    %c0_10 = arith.constant 0 : index
    %c0_11 = arith.constant 0 : index
    %c0_12 = arith.constant 0 : index
    %4 = vector.load %arg4[%c0_8, %c0_9, %c0_10, %c0_11, %c0_12] : memref<1x2x1x16x16xf32, #tpu.memory_space<vmem>>, vector<1x1x1x16x16xf32>
    %5 = vector.shape_cast %4 : vector<1x1x1x16x16xf32> to vector<16x16xf32>
    %cst = arith.constant dense<0.000000e+00> : vector<96x128xf32>
    %6 = tpu.matmul %1, %3, %cst {dimension_numbers = #tpu.dot_dimension_numbers<[1], [0], [0], [1], [0, 0, 1, 1], [], []>} : vector<96x128xf32>, vector<128x128xf32>, vector<96x128xf32> -> vector<96x128xf32>
    %7 = vector.extract_strided_slice %6 {offsets = [0, 0], sizes = [16, 128], strides = [1, 1]} : vector<96x128xf32> to vector<16x128xf32>
    %cst_13 = arith.constant dense<0.000000e+00> : vector<16x128xf32>
    %8 = tpu.matmul %5, %7, %cst_13 {dimension_numbers = #tpu.dot_dimension_numbers<[1], [0], [0], [1], [0, 0, 1, 1], [], []>} : vector<16x16xf32>, vector<16x128xf32>, vector<16x128xf32> -> vector<16x128xf32>
    %9 = vector.extract_strided_slice %6 {offsets = [16, 0], sizes = [16, 128], strides = [1, 1]} : vector<96x128xf32> to vector<16x128xf32>
    %cst_14 = arith.constant dense<0.000000e+00> : vector<16x128xf32>
    %10 = tpu.matmul %5, %9, %cst_14 {dimension_numbers = #tpu.dot_dimension_numbers<[1], [0], [0], [1], [0, 0, 1, 1], [], []>} : vector<16x16xf32>, vector<16x128xf32>, vector<16x128xf32> -> vector<16x128xf32>
    %11 = vector.extract_strided_slice %6 {offsets = [32, 0], sizes = [16, 128], strides = [1, 1]} : vector<96x128xf32> to vector<16x128xf32>
    %cst_15 = arith.constant dense<0.000000e+00> : vector<16x128xf32>
    %12 = tpu.matmul %5, %11, %cst_15 {dimension_numbers = #tpu.dot_dimension_numbers<[1], [0], [0], [1], [0, 0, 1, 1], [], []>} : vector<16x16xf32>, vector<16x128xf32>, vector<16x128xf32> -> vector<16x128xf32>
    %13 = vector.extract_strided_slice %6 {offsets = [48, 0], sizes = [16, 128], strides = [1, 1]} : vector<96x128xf32> to vector<16x128xf32>
    %cst_16 = arith.constant dense<0.000000e+00> : vector<16x128xf32>
    %14 = tpu.matmul %5, %13, %cst_16 {dimension_numbers = #tpu.dot_dimension_numbers<[1], [0], [0], [1], [0, 0, 1, 1], [], []>} : vector<16x16xf32>, vector<16x128xf32>, vector<16x128xf32> -> vector<16x128xf32>
    %15 = vector.extract_strided_slice %6 {offsets = [64, 0], sizes = [16, 128], strides = [1, 1]} : vector<96x128xf32> to vector<16x128xf32>
    %cst_17 = arith.constant dense<0.000000e+00> : vector<16x128xf32>
    %16 = tpu.matmul %5, %15, %cst_17 {dimension_numbers = #tpu.dot_dimension_numbers<[1], [0], [0], [1], [0, 0, 1, 1], [], []>} : vector<16x16xf32>, vector<16x128xf32>, vector<16x128xf32> -> vector<16x128xf32>
    %17 = vector.extract_strided_slice %6 {offsets = [80, 0], sizes = [16, 128], strides = [1, 1]} : vector<96x128xf32> to vector<16x128xf32>
    %cst_18 = arith.constant dense<0.000000e+00> : vector<16x128xf32>
    %18 = tpu.matmul %5, %17, %cst_18 {dimension_numbers = #tpu.dot_dimension_numbers<[1], [0], [0], [1], [0, 0, 1, 1], [], []>} : vector<16x16xf32>, vector<16x128xf32>, vector<16x128xf32> -> vector<16x128xf32>
    %c0_19 = arith.constant 0 : index
    %c1 = arith.constant 1 : index
    %c0_20 = arith.constant 0 : index
    %c0_21 = arith.constant 0 : index
    %19 = vector.load %arg2[%c0_19, %c1, %c0_20, %c0_21] : memref<1x2x96x128xf32, #tpu.memory_space<vmem>>, vector<1x1x96x128xf32>
    %20 = vector.shape_cast %19 : vector<1x1x96x128xf32> to vector<96x128xf32>
    %c0_22 = arith.constant 0 : index
    %c1_23 = arith.constant 1 : index
    %c0_24 = arith.constant 0 : index
    %c0_25 = arith.constant 0 : index
    %c0_26 = arith.constant 0 : index
    %21 = vector.load %arg3[%c0_22, %c1_23, %c0_24, %c0_25, %c0_26] : memref<1x2x1x128x128xf32, #tpu.memory_space<vmem>>, vector<1x1x1x128x128xf32>
    %22 = vector.shape_cast %21 : vector<1x1x1x128x128xf32> to vector<128x128xf32>
    %c0_27 = arith.constant 0 : index
    %c1_28 = arith.constant 1 : index
    %c0_29 = arith.constant 0 : index
    %c0_30 = arith.constant 0 : index
    %c0_31 = arith.constant 0 : index
    %23 = vector.load %arg4[%c0_27, %c1_28, %c0_29, %c0_30, %c0_31] : memref<1x2x1x16x16xf32, #tpu.memory_space<vmem>>, vector<1x1x1x16x16xf32>
    %24 = vector.shape_cast %23 : vector<1x1x1x16x16xf32> to vector<16x16xf32>
    %cst_32 = arith.constant dense<0.000000e+00> : vector<96x128xf32>
    %25 = tpu.matmul %20, %22, %cst_32 {dimension_numbers = #tpu.dot_dimension_numbers<[1], [0], [0], [1], [0, 0, 1, 1], [], []>} : vector<96x128xf32>, vector<128x128xf32>, vector<96x128xf32> -> vector<96x128xf32>
    %26 = vector.extract_strided_slice %25 {offsets = [0, 0], sizes = [16, 128], strides = [1, 1]} : vector<96x128xf32> to vector<16x128xf32>
    %cst_33 = arith.constant dense<0.000000e+00> : vector<16x128xf32>
    %27 = tpu.matmul %24, %26, %cst_33 {dimension_numbers = #tpu.dot_dimension_numbers<[1], [0], [0], [1], [0, 0, 1, 1], [], []>} : vector<16x16xf32>, vector<16x128xf32>, vector<16x128xf32> -> vector<16x128xf32>
    %28 = arith.mulf %8, %27 : vector<16x128xf32>
    %29 = vector.extract_strided_slice %25 {offsets = [16, 0], sizes = [16, 128], strides = [1, 1]} : vector<96x128xf32> to vector<16x128xf32>
    %cst_34 = arith.constant dense<0.000000e+00> : vector<16x128xf32>
    %30 = tpu.matmul %24, %29, %cst_34 {dimension_numbers = #tpu.dot_dimension_numbers<[1], [0], [0], [1], [0, 0, 1, 1], [], []>} : vector<16x16xf32>, vector<16x128xf32>, vector<16x128xf32> -> vector<16x128xf32>
    %31 = arith.mulf %10, %30 : vector<16x128xf32>
    %32 = vector.extract_strided_slice %25 {offsets = [32, 0], sizes = [16, 128], strides = [1, 1]} : vector<96x128xf32> to vector<16x128xf32>
    %cst_35 = arith.constant dense<0.000000e+00> : vector<16x128xf32>
    %33 = tpu.matmul %24, %32, %cst_35 {dimension_numbers = #tpu.dot_dimension_numbers<[1], [0], [0], [1], [0, 0, 1, 1], [], []>} : vector<16x16xf32>, vector<16x128xf32>, vector<16x128xf32> -> vector<16x128xf32>
    %34 = arith.mulf %12, %33 : vector<16x128xf32>
    %35 = vector.extract_strided_slice %25 {offsets = [48, 0], sizes = [16, 128], strides = [1, 1]} : vector<96x128xf32> to vector<16x128xf32>
    %cst_36 = arith.constant dense<0.000000e+00> : vector<16x128xf32>
    %36 = tpu.matmul %24, %35, %cst_36 {dimension_numbers = #tpu.dot_dimension_numbers<[1], [0], [0], [1], [0, 0, 1, 1], [], []>} : vector<16x16xf32>, vector<16x128xf32>, vector<16x128xf32> -> vector<16x128xf32>
    %37 = arith.mulf %14, %36 : vector<16x128xf32>
    %38 = vector.extract_strided_slice %25 {offsets = [64, 0], sizes = [16, 128], strides = [1, 1]} : vector<96x128xf32> to vector<16x128xf32>
    %cst_37 = arith.constant dense<0.000000e+00> : vector<16x128xf32>
    %39 = tpu.matmul %24, %38, %cst_37 {dimension_numbers = #tpu.dot_dimension_numbers<[1], [0], [0], [1], [0, 0, 1, 1], [], []>} : vector<16x16xf32>, vector<16x128xf32>, vector<16x128xf32> -> vector<16x128xf32>
    %40 = arith.mulf %16, %39 : vector<16x128xf32>
    %41 = vector.extract_strided_slice %25 {offsets = [80, 0], sizes = [16, 128], strides = [1, 1]} : vector<96x128xf32> to vector<16x128xf32>
    %cst_38 = arith.constant dense<0.000000e+00> : vector<16x128xf32>
    %42 = tpu.matmul %24, %41, %cst_38 {dimension_numbers = #tpu.dot_dimension_numbers<[1], [0], [0], [1], [0, 0, 1, 1], [], []>} : vector<16x16xf32>, vector<16x128xf32>, vector<16x128xf32> -> vector<16x128xf32>
    %43 = arith.mulf %18, %42 : vector<16x128xf32>
    %44 = arith.addf %28, %37 : vector<16x128xf32>
    %cst_39 = arith.constant 5.000000e-01 : f32
    %45 = vector.broadcast %cst_39 : f32 to vector<16x128xf32>
    %46 = arith.mulf %44, %45 : vector<16x128xf32>
    %c0_40 = arith.constant 0 : index
    %c0_41 = arith.constant 0 : index
    %c0_42 = arith.constant 0 : index
    %c0_43 = arith.constant 0 : index
    %c0_44 = arith.constant 0 : index
    %47 = vector.load %arg5[%c0_40, %c0_41, %c0_42, %c0_43, %c0_44] : memref<1x1x3x16x128xf32, #tpu.memory_space<vmem>>, vector<1x1x1x16x128xf32>
    %48 = vector.shape_cast %47 : vector<1x1x1x16x128xf32> to vector<16x128xf32>
    %49 = vector.shape_cast %46 : vector<16x128xf32> to vector<1x1x1x16x128xf32>
    tpu.vector_store %arg5[%c0_40, %c0_41, %c0_42, %c0_43, %c0_44], %49 {strides = array<i32>} : memref<1x1x3x16x128xf32, #tpu.memory_space<vmem>>, vector<1x1x1x16x128xf32>,
    %50 = arith.addf %31, %40 : vector<16x128xf32>
    %cst_45 = arith.constant 5.000000e-01 : f32
    %51 = vector.broadcast %cst_45 : f32 to vector<16x128xf32>
    %52 = arith.mulf %50, %51 : vector<16x128xf32>
    %c0_46 = arith.constant 0 : index
    %c0_47 = arith.constant 0 : index
    %c1_48 = arith.constant 1 : index
    %c0_49 = arith.constant 0 : index
    %c0_50 = arith.constant 0 : index
    %53 = vector.load %arg5[%c0_46, %c0_47, %c1_48, %c0_49, %c0_50] : memref<1x1x3x16x128xf32, #tpu.memory_space<vmem>>, vector<1x1x1x16x128xf32>
    %54 = vector.shape_cast %53 : vector<1x1x1x16x128xf32> to vector<16x128xf32>
    %55 = vector.shape_cast %52 : vector<16x128xf32> to vector<1x1x1x16x128xf32>
    tpu.vector_store %arg5[%c0_46, %c0_47, %c1_48, %c0_49, %c0_50], %55 {strides = array<i32>} : memref<1x1x3x16x128xf32, #tpu.memory_space<vmem>>, vector<1x1x1x16x128xf32>,
    %56 = arith.addf %34, %43 : vector<16x128xf32>
    %cst_51 = arith.constant 5.000000e-01 : f32
    %57 = vector.broadcast %cst_51 : f32 to vector<16x128xf32>
    %58 = arith.mulf %56, %57 : vector<16x128xf32>
    %c0_52 = arith.constant 0 : index
    %c0_53 = arith.constant 0 : index
    %c2 = arith.constant 2 : index
    %c0_54 = arith.constant 0 : index
    %c0_55 = arith.constant 0 : index
    %59 = vector.load %arg5[%c0_52, %c0_53, %c2, %c0_54, %c0_55] : memref<1x1x3x16x128xf32, #tpu.memory_space<vmem>>, vector<1x1x1x16x128xf32>
    %60 = vector.shape_cast %59 : vector<1x1x1x16x128xf32> to vector<16x128xf32>
    %61 = vector.shape_cast %58 : vector<16x128xf32> to vector<1x1x1x16x128xf32>
    tpu.vector_store %arg5[%c0_52, %c0_53, %c2, %c0_54, %c0_55], %61 {strides = array<i32>} : memref<1x1x3x16x128xf32, #tpu.memory_space<vmem>>, vector<1x1x1x16x128xf32>,
    return
  }
  func.func @transform_0(%arg0: i32, %arg1: i32) -> (i32, i32, i32, i32) {
    %c0_i32 = arith.constant 0 : i32
    %c0_i32_0 = arith.constant 0 : i32
    %c0_i32_1 = arith.constant 0 : i32
    %c0_i32_2 = arith.constant 0 : i32
    return %arg0, %c0_i32, %c0_i32_0, %c0_i32_1 : i32, i32, i32, i32
  }
  func.func @transform_1(%arg0: i32, %arg1: i32) -> (i32, i32, i32, i32, i32) {
    %c0_i32 = arith.constant 0 : i32
    %c0_i32_0 = arith.constant 0 : i32
    %c0_i32_1 = arith.constant 0 : i32
    %c0_i32_2 = arith.constant 0 : i32
    return %arg0, %c0_i32, %arg1, %c0_i32_0, %c0_i32_1 : i32, i32, i32, i32, i32
  }
  func.func @transform_2(%arg0: i32, %arg1: i32) -> (i32, i32, i32, i32, i32) {
    %c0_i32 = arith.constant 0 : i32
    %c0_i32_0 = arith.constant 0 : i32
    %c0_i32_1 = arith.constant 0 : i32
    %c0_i32_2 = arith.constant 0 : i32
    return %arg0, %c0_i32, %arg1, %c0_i32_0, %c0_i32_1 : i32, i32, i32, i32, i32
  }
  func.func @transform_3(%arg0: i32, %arg1: i32) -> (i32, i32, i32, i32, i32) {
    %c0_i32 = arith.constant 0 : i32
    %c0_i32_0 = arith.constant 0 : i32
    %c0_i32_1 = arith.constant 0 : i32
    %c0_i32_2 = arith.constant 0 : i32
    return %arg0, %arg1, %c0_i32, %c0_i32_0, %c0_i32_1 : i32, i32, i32, i32, i32
  }
}

</mosaic_0001>

<llo_original>
// kernel: multilayer_forward.1
$region0: #{multilayer_forward.1}
  #allocation0 [shape = 'u32[]', space=smem, size = 0x4, offset = 0x4, fixed_abs, tag = 'smem constant byte address 0x4 - core index']
  #allocation1 [shape = 'u32[144,128]{1,0:T(1,128)}', space=vmem, size = 0x12000, scoped, tag = 'internal scratch']
  %s0 = inlined_call_operand.vmem [shape: f32[2,2,96,128], index: 0, kind: input, shape index: {}]
  %s1 = inlined_call_operand.vmem [shape: f32[2,2,9,128,128], index: 1, kind: input, shape index: {}]
  %s2 = inlined_call_operand.vmem [shape: f32[2,2,9,16,16], index: 2, kind: input, shape index: {}]
  %s3 = inlined_call_operand.hbm [shape: f32[2,9,3,16,128], index: 3, kind: output, shape index: {}]
  %s4 = sld [smem:[#allocation0]]
  $region121: #{multilayer_forward.1} parent=0
    _
  %s6 = ssub.s32 1, %s4
  %s7 = scalar_select 0, %s6, %s4
  $region1: #{multilayer_forward.1} parent=0
    #allocation2 [shape = 'u8[262144]{0}', space=vmem, size = 0x40000, scoped, tag = 'input window, operand 1']
    #allocation3 [shape = 'u8[32768]{0}', space=vmem, size = 0x8000, scoped, tag = 'input window, operand 2']
    #allocation4 [shape = 'u8[49152]{0}', space=vmem, size = 0xc000, scoped, tag = 'output window, operand 0']
    #allocation5 [shape = 's32[2]{0}', space=sflag, size = 0x8, scoped, tag = 'scoped memory for multilayer_forward.1']
    %8 = vsyncpa [#allocation5], 0
    %s9 = scalar_lea.sflag [#allocation5], 1
    %10 = vsyncpa %s9, 0
    loop: start=0, step=1, limit=20
    $region2: #{multilayer_forward.1} parent=1 // loop_pre_header
      _
    $region3: #{multilayer_forward.1} parent=1 // loop_header
      %s12 = sphi 0, %s16
      %p13 = scmp.ge.s32.totalorder %s12, 20
      %s19 = sphi 0, %s31
      %s20 = sphi 0, %s27
      %s21 = sphi 0, %s19
      %s22 = sphi 0, %s20
      %s23 = sphi 0, %s21
      %s24 = sphi 0, %s22
      %s34 = sphi 0, %s36
      %s37 = sphi 0, %s34
      %s38 = sphi 0, %s37
      %s54 = sphi 0, %s38
      %s62 = sphi 0, %s64
      %s65 = sphi 0, %s62
      %s66 = sphi 0, %s65
      %s82 = sphi 0, %s66
      %s90 = sphi 0, %s92
      %s93 = sphi 0, %s90
      %s94 = sphi 0, %s93
      %s110 = sphi 0, %s94
      %s118 = sphi 0, %s120
      %s121 = sphi 0, %s118
      %s122 = sphi 0, %s121
      %s138 = sphi 0, %s122
    $region4: #{multilayer_forward.1} parent=1 // loop_header_branch
      %15 = sbr.rel (%p13) target = $region8
    $region5: #{multilayer_forward.1} parent=1 // loop_body
      %s17 = ssub.s32 %s12, 1
      %s18 = ssub.s32 %s12, 2
      %s25 = sadd.s32 1, %s20
      %p26 = scmp.ge.s32.totalorder %s25, 9
      %s27 = scalar_select %p26, 0, %s25
      %s28 = sadd.s32 1, %s19
      %s29 = scalar_select %p26, %s28, %s19
      %p30 = scmp.ge.s32.totalorder %s29, 2
      %s31 = scalar_select %p30, 0, %s29
      %s32 = ssub.s32 %s19, %s31
      %p33 = scmp.eq.s32.totalorder %s32, 0
      %s35 = sadd.s32 %s34, 1
      %s36 = scalar_select %p33, %s34, %s35
      %p39 = pneg %p33
      %p40 = scmp.eq.s32.totalorder %s12, 17
      %p41 = por %p39, %p40
      %p42 = scmp.ne.s32.totalorder %s34, %s37
      %p43 = scmp.eq.s32.totalorder %s12, 0
      %p44 = por %p42, %p43
      %p45 = scmp.ne.s32.totalorder %s34, %s37
      %p46 = scmp.eq.s32.totalorder %s17, 17
      %p47 = por %p45, %p46
      %p48 = scmp.ne.s32.totalorder %s37, %s38
      %p49 = scmp.eq.s32.totalorder %s17, 0
      %p50 = por %p48, %p49
      %p51 = scmp.ne.s32.totalorder %s37, %s38
      %p52 = scmp.eq.s32.totalorder %s18, 17
      %p53 = por %p51, %p52
      %p55 = scmp.ne.s32.totalorder %s38, %s54
      %p56 = scmp.eq.s32.totalorder %s18, 0
      %p57 = por %p55, %p56
      %s58 = ssub.s32 %s19, %s31
      %s59 = ssub.s32 %s20, %s27
      %s60 = sor.u32 %s58, %s59
      %p61 = scmp.eq.s32.totalorder %s60, 0
      %s63 = sadd.s32 %s62, 1
      %s64 = scalar_select %p61, %s62, %s63
      %p67 = pneg %p61
      %p68 = scmp.eq.s32.totalorder %s12, 17
      %p69 = por %p67, %p68
      %p70 = scmp.ne.s32.totalorder %s62, %s65
      %p71 = scmp.eq.s32.totalorder %s12, 0
      %p72 = por %p70, %p71
      %p73 = scmp.ne.s32.totalorder %s62, %s65
      %p74 = scmp.eq.s32.totalorder %s17, 17
      %p75 = por %p73, %p74
      %p76 = scmp.ne.s32.totalorder %s65, %s66
      %p77 = scmp.eq.s32.totalorder %s17, 0
      %p78 = por %p76, %p77
      %p79 = scmp.ne.s32.totalorder %s65, %s66
      %p80 = scmp.eq.s32.totalorder %s18, 17
      %p81 = por %p79, %p80
      %p83 = scmp.ne.s32.totalorder %s66, %s82
      %p84 = scmp.eq.s32.totalorder %s18, 0
      %p85 = por %p83, %p84
      %s86 = ssub.s32 %s19, %s31
      %s87 = ssub.s32 %s20, %s27
      %s88 = sor.u32 %s86, %s87
      %p89 = scmp.eq.s32.totalorder %s88, 0
      %s91 = sadd.s32 %s90, 1
      %s92 = scalar_select %p89, %s90, %s91
      %p95 = pneg %p89
      %p96 = scmp.eq.s32.totalorder %s12, 17
      %p97 = por %p95, %p96
      %p98 = scmp.ne.s32.totalorder %s90, %s93
      %p99 = scmp.eq.s32.totalorder %s12, 0
      %p100 = por %p98, %p99
      %p101 = scmp.ne.s32.totalorder %s90, %s93
      %p102 = scmp.eq.s32.totalorder %s17, 17
      %p103 = por %p101, %p102
      %p104 = scmp.ne.s32.totalorder %s93, %s94
      %p105 = scmp.eq.s32.totalorder %s17, 0
      %p106 = por %p104, %p105
      %p107 = scmp.ne.s32.totalorder %s93, %s94
      %p108 = scmp.eq.s32.totalorder %s18, 17
      %p109 = por %p107, %p108
      %p111 = scmp.ne.s32.totalorder %s94, %s110
      %p112 = scmp.eq.s32.totalorder %s18, 0
      %p113 = por %p111, %p112
      %s114 = ssub.s32 %s19, %s31
      %s115 = ssub.s32 %s20, %s27
      %s116 = sor.u32 %s114, %s115
      %p117 = scmp.eq.s32.totalorder %s116, 0
      %s119 = sadd.s32 %s118, 1
      %s120 = scalar_select %p117, %s118, %s119
      %p123 = pneg %p117
      %p124 = scmp.eq.s32.totalorder %s12, 17
      %p125 = por %p123, %p124
      %p126 = scmp.ne.s32.totalorder %s118, %s121
      %p127 = scmp.eq.s32.totalorder %s12, 0
      %p128 = por %p126, %p127
      %p129 = scmp.ne.s32.totalorder %s118, %s121
      %p130 = scmp.eq.s32.totalorder %s17, 17
      %p131 = por %p129, %p130
      %p132 = scmp.ne.s32.totalorder %s121, %s122
      %p133 = scmp.eq.s32.totalorder %s17, 0
      %p134 = por %p132, %p133
      %p135 = scmp.ne.s32.totalorder %s121, %s122
      %p136 = scmp.eq.s32.totalorder %s18, 17
      %p137 = por %p135, %p136
      %p139 = scmp.ne.s32.totalorder %s122, %s138
      %p140 = scmp.eq.s32.totalorder %s18, 0
      %p141 = por %p139, %p140
      %p142 = scmp.le.s32.totalorder 1, %s12
      %p143 = scmp.lt.s32.totalorder %s12, 19
      %p144 = pnand %p142, %p143
      %p145 = pneg %p144
      // Predicated region
      $region9: #{multilayer_forward.1} parent=5 // pred_check
        _
      $region10: #{multilayer_forward.1} parent=5 // pred_check_branch
        %147 = sbr.rel (%p144) target = $region12
      $region11: #{multilayer_forward.1} parent=5 // pred_region
        %s148 = ssub.s32 %s12, 1
      $region12: #{multilayer_forward.1} parent=5 // pred_fallthru
        _
      %p149 = scmp.lt.s32.totalorder %s12, 18
      // Predicated region
      $region13: #{multilayer_forward.1} parent=5 // pred_check
        %p150 = pneg %p149
      $region14: #{multilayer_forward.1} parent=5 // pred_check_branch
        %152 = sbr.rel (%p150) target = $region16
      $region15: #{multilayer_forward.1} parent=5 // pred_region
        // Predicated region
        $region17: #{multilayer_forward.1} parent=15 // pred_check
          %p153 = pneg %p44
        $region18: #{multilayer_forward.1} parent=15 // pred_check_branch
          %155 = sbr.rel (%p153) target = $region20
        $region19: #{multilayer_forward.1} parent=15 // pred_region
          %p156 = scmp.lt.s32.totalorder %s19, 1
          %s157 = scalar_select %p156, %s19, 1
          %s158 = smul.addr %s157, 24
          %s159 = smul.addr %s158, 8
          %s160 = scalar_lea.vmem %s0, %s159
        $region20: #{multilayer_forward.1} parent=15 // pred_fallthru
          _
        // Predicated region
        $region21: #{multilayer_forward.1} parent=15 // pred_check
          %p161 = pneg %p72
        $region22: #{multilayer_forward.1} parent=15 // pred_check_branch
          %163 = sbr.rel (%p161) target = $region24
        $region23: #{multilayer_forward.1} parent=15 // pred_region
          %s164 = sand.u32 %s62, 1
          %s165 = sand.u32 %s62, 1
          %s166 = smul.addr %s165, 256
          %s167 = scalar_lea.vmem [#allocation2], %s166
          %s168 = smul.addr %s20, 16
          %s169 = smul.addr %s19, 288
          %s170 = sadd.s32 %s168, %s169
          %s171 = smul.addr %s170, 8
          %s172 = scalar_lea.vmem %s1, %s171
          // Predicated region
          $region25: #{multilayer_forward.1} parent=23 // pred_check
            _
          $region26: #{multilayer_forward.1} parent=23 // pred_check_branch
            %174 = sbr.rel (0) target = $region28
          $region27: #{multilayer_forward.1} parent=23 // pred_region
            // Predicated region
            $region29: #{multilayer_forward.1} parent=27 // pred_check
              _
            $region30: #{multilayer_forward.1} parent=27 // pred_check_branch
              %176 = sbr.rel (0) target = $region32
            $region31: #{multilayer_forward.1} parent=27 // pred_region
              // Predicated region
              $region44: #{multilayer_forward.1} parent=31 // pred_check
                _
              $region45: #{multilayer_forward.1} parent=31 // pred_check_branch
                %253 = sbr.rel (0) target = $region47
              $region46: #{multilayer_forward.1} parent=31 // pred_region
                loop: start=0, step=1, limit=1
                $region48: #{multilayer_forward.1} parent=46 // loop_pre_header
                  _
                $region49: #{multilayer_forward.1} parent=46 // loop_header
                  %s255 = sphi 0, %s259
                  %p256 = scmp.ge.s32.totalorder %s255, 1
                  %s260 = sphi %s172, %s172
                  %s261 = sphi %s167, %s167
                $region50: #{multilayer_forward.1} parent=46 // loop_header_branch
                  %258 = sbr.rel (%p256) target = $region54
                $region51: #{multilayer_forward.1} parent=46 // loop_body
                  %v262 = vld [vmem:[%s260] sm:$0xff]
                  %263 = vst [vmem:[%s261] sm:$0xff] %v262
                  %v264 = vld [vmem:[%s260 + $0x8] sm:$0xff]
                  %265 = vst [vmem:[%s261 + $0x8] sm:$0xff] %v264
                  %v266 = vld [vmem:[%s260 + $0x10] sm:$0xff]
                  %267 = vst [vmem:[%s261 + $0x10] sm:$0xff] %v266
                  %v268 = vld [vmem:[%s260 + $0x18] sm:$0xff]
                  %269 = vst [vmem:[%s261 + $0x18] sm:$0xff] %v268
                  %v270 = vld [vmem:[%s260 + $0x20] sm:$0xff]
                  %271 = vst [vmem:[%s261 + $0x20] sm:$0xff] %v270
                  %v272 = vld [vmem:[%s260 + $0x28] sm:$0xff]
                  %273 = vst [vmem:[%s261 + $0x28] sm:$0xff] %v272
                  %v274 = vld [vmem:[%s260 + $0x30] sm:$0xff]
                  %275 = vst [vmem:[%s261 + $0x30] sm:$0xff] %v274
                  %v276 = vld [vmem:[%s260 + $0x38] sm:$0xff]
                  %277 = vst [vmem:[%s261 + $0x38] sm:$0xff] %v276
                  %v278 = vld [vmem:[%s260 + $0x40] sm:$0xff]
                  %279 = vst [vmem:[%s261 + $0x40] sm:$0xff] %v278
                  %v280 = vld [vmem:[%s260 + $0x48] sm:$0xff]
                  %281 = vst [vmem:[%s261 + $0x48] sm:$0xff] %v280
                  %v282 = vld [vmem:[%s260 + $0x50] sm:$0xff]
                  %283 = vst [vmem:[%s261 + $0x50] sm:$0xff] %v282
                  %v284 = vld [vmem:[%s260 + $0x58] sm:$0xff]
                  %285 = vst [vmem:[%s261 + $0x58] sm:$0xff] %v284
                  %v286 = vld [vmem:[%s260 + $0x60] sm:$0xff]
                  %287 = vst [vmem:[%s261 + $0x60] sm:$0xff] %v286
                  %v288 = vld [vmem:[%s260 + $0x68] sm:$0xff]
                  %289 = vst [vmem:[%s261 + $0x68] sm:$0xff] %v288
                  %v290 = vld [vmem:[%s260 + $0x70] sm:$0xff]
                  %291 = vst [vmem:[%s261 + $0x70] sm:$0xff] %v290
                  %v292 = vld [vmem:[%s260 + $0x78] sm:$0xff]
                  %293 = vst [vmem:[%s261 + $0x78] sm:$0xff] %v292
                  %v294 = vld [vmem:[%s260 + $0x480] sm:$0xff]
                  %295 = vst [vmem:[%s261 + $0x80] sm:$0xff] %v294
                  %v296 = vld [vmem:[%s260 + $0x488] sm:$0xff]
                  %297 = vst [vmem:[%s261 + $0x88] sm:$0xff] %v296
                  %v298 = vld [vmem:[%s260 + $0x490] sm:$0xff]
                  %299 = vst [vmem:[%s261 + $0x90] sm:$0xff] %v298
                  %v300 = vld [vmem:[%s260 + $0x498] sm:$0xff]
                  %301 = vst [vmem:[%s261 + $0x98] sm:$0xff] %v300
                  %v302 = vld [vmem:[%s260 + $0x4a0] sm:$0xff]
                  %303 = vst [vmem:[%s261 + $0xa0] sm:$0xff] %v302
                  %v304 = vld [vmem:[%s260 + $0x4a8] sm:$0xff]
                  %305 = vst [vmem:[%s261 + $0xa8] sm:$0xff] %v304
                  %v306 = vld [vmem:[%s260 + $0x4b0] sm:$0xff]
                  %307 = vst [vmem:[%s261 + $0xb0] sm:$0xff] %v306
                  %v308 = vld [vmem:[%s260 + $0x4b8] sm:$0xff]
                  %309 = vst [vmem:[%s261 + $0xb8] sm:$0xff] %v308
                  %v310 = vld [vmem:[%s260 + $0x4c0] sm:$0xff]
                  %311 = vst [vmem:[%s261 + $0xc0] sm:$0xff] %v310
                  %v312 = vld [vmem:[%s260 + $0x4c8] sm:$0xff]
                  %313 = vst [vmem:[%s261 + $0xc8] sm:$0xff] %v312
                  %v314 = vld [vmem:[%s260 + $0x4d0] sm:$0xff]
                  %315 = vst [vmem:[%s261 + $0xd0] sm:$0xff] %v314
                  %v316 = vld [vmem:[%s260 + $0x4d8] sm:$0xff]
                  %317 = vst [vmem:[%s261 + $0xd8] sm:$0xff] %v316
                  %v318 = vld [vmem:[%s260 + $0x4e0] sm:$0xff]
                  %319 = vst [vmem:[%s261 + $0xe0] sm:$0xff] %v318
                  %v320 = vld [vmem:[%s260 + $0x4e8] sm:$0xff]
                  %321 = vst [vmem:[%s261 + $0xe8] sm:$0xff] %v320
                  %v322 = vld [vmem:[%s260 + $0x4f0] sm:$0xff]
                  %323 = vst [vmem:[%s261 + $0xf0] sm:$0xff] %v322
                  %v324 = vld [vmem:[%s260 + $0x4f8] sm:$0xff]
                  %325 = vst [vmem:[%s261 + $0xf8] sm:$0xff] %v324
                $region52: #{multilayer_forward.1} parent=46 // loop_footer
                  %s259 = sadd.s32 1, %s255
                $region53: #{multilayer_forward.1} parent=46 // loop_footer_branch
                  %254 = sbr.rel target = $region49
                $region54: #{multilayer_forward.1} parent=46 // loop_exit
                  _
              $region47: #{multilayer_forward.1} parent=31 // pred_fallthru
                _
              // Predicated region
              $region55: #{multilayer_forward.1} parent=31 // pred_check
                _
              $region56: #{multilayer_forward.1} parent=31 // pred_check_branch
                %327 = sbr.rel target = $region58
              $region57: #{multilayer_forward.1} parent=31 // pred_region
                _
              $region58: #{multilayer_forward.1} parent=31 // pred_fallthru
                _
            $region32: #{multilayer_forward.1} parent=27 // pred_fallthru
              _
            // Predicated region
            $region33: #{multilayer_forward.1} parent=27 // pred_check
              _
            $region34: #{multilayer_forward.1} parent=27 // pred_check_branch
              %178 = sbr.rel target = $region36
            $region35: #{multilayer_forward.1} parent=27 // pred_region
              loop: start=0, step=1, limit=1
              $region37: #{multilayer_forward.1} parent=35 // loop_pre_header
                _
              $region38: #{multilayer_forward.1} parent=35 // loop_header
                %s181 = sphi 0, %s185
                %p182 = scmp.ge.s32.totalorder %s181, 1
                %s186 = sphi %s172, %s172
                %s187 = sphi %s167, %s167
              $region39: #{multilayer_forward.1} parent=35 // loop_header_branch
                %184 = sbr.rel (%p182) target = $region43
              $region40: #{multilayer_forward.1} parent=35 // loop_body
                %v188 = vld [vmem:[%s186] sm:$0xff]
                %189 = vst [vmem:[%s187] sm:$0xff] %v188
                %v190 = vld [vmem:[%s186 + $0x8] sm:$0xff]
                %191 = vst [vmem:[%s187 + $0x8] sm:$0xff] %v190
                %v192 = vld [vmem:[%s186 + $0x10] sm:$0xff]
                %193 = vst [vmem:[%s187 + $0x10] sm:$0xff] %v192
                %v194 = vld [vmem:[%s186 + $0x18] sm:$0xff]
                %195 = vst [vmem:[%s187 + $0x18] sm:$0xff] %v194
                %v196 = vld [vmem:[%s186 + $0x20] sm:$0xff]
                %197 = vst [vmem:[%s187 + $0x20] sm:$0xff] %v196
                %v198 = vld [vmem:[%s186 + $0x28] sm:$0xff]
                %199 = vst [vmem:[%s187 + $0x28] sm:$0xff] %v198
                %v200 = vld [vmem:[%s186 + $0x30] sm:$0xff]
                %201 = vst [vmem:[%s187 + $0x30] sm:$0xff] %v200
                %v202 = vld [vmem:[%s186 + $0x38] sm:$0xff]
                %203 = vst [vmem:[%s187 + $0x38] sm:$0xff] %v202
                %v204 = vld [vmem:[%s186 + $0x40] sm:$0xff]
                %205 = vst [vmem:[%s187 + $0x40] sm:$0xff] %v204
                %v206 = vld [vmem:[%s186 + $0x48] sm:$0xff]
                %207 = vst [vmem:[%s187 + $0x48] sm:$0xff] %v206
                %v208 = vld [vmem:[%s186 + $0x50] sm:$0xff]
                %209 = vst [vmem:[%s187 + $0x50] sm:$0xff] %v208
                %v210 = vld [vmem:[%s186 + $0x58] sm:$0xff]
                %211 = vst [vmem:[%s187 + $0x58] sm:$0xff] %v210
                %v212 = vld [vmem:[%s186 + $0x60] sm:$0xff]
                %213 = vst [vmem:[%s187 + $0x60] sm:$0xff] %v212
                %v214 = vld [vmem:[%s186 + $0x68] sm:$0xff]
                %215 = vst [vmem:[%s187 + $0x68] sm:$0xff] %v214
                %v216 = vld [vmem:[%s186 + $0x70] sm:$0xff]
                %217 = vst [vmem:[%s187 + $0x70] sm:$0xff] %v216
                %v218 = vld [vmem:[%s186 + $0x78] sm:$0xff]
                %219 = vst [vmem:[%s187 + $0x78] sm:$0xff] %v218
                %v220 = vld [vmem:[%s186 + $0x480] sm:$0xff]
                %221 = vst [vmem:[%s187 + $0x80] sm:$0xff] %v220
                %v222 = vld [vmem:[%s186 + $0x488] sm:$0xff]
                %223 = vst [vmem:[%s187 + $0x88] sm:$0xff] %v222
                %v224 = vld [vmem:[%s186 + $0x490] sm:$0xff]
                %225 = vst [vmem:[%s187 + $0x90] sm:$0xff] %v224
                %v226 = vld [vmem:[%s186 + $0x498] sm:$0xff]
                %227 = vst [vmem:[%s187 + $0x98] sm:$0xff] %v226
                %v228 = vld [vmem:[%s186 + $0x4a0] sm:$0xff]
                %229 = vst [vmem:[%s187 + $0xa0] sm:$0xff] %v228
                %v230 = vld [vmem:[%s186 + $0x4a8] sm:$0xff]
                %231 = vst [vmem:[%s187 + $0xa8] sm:$0xff] %v230
                %v232 = vld [vmem:[%s186 + $0x4b0] sm:$0xff]
                %233 = vst [vmem:[%s187 + $0xb0] sm:$0xff] %v232
                %v234 = vld [vmem:[%s186 + $0x4b8] sm:$0xff]
                %235 = vst [vmem:[%s187 + $0xb8] sm:$0xff] %v234
                %v236 = vld [vmem:[%s186 + $0x4c0] sm:$0xff]
                %237 = vst [vmem:[%s187 + $0xc0] sm:$0xff] %v236
                %v238 = vld [vmem:[%s186 + $0x4c8] sm:$0xff]
                %239 = vst [vmem:[%s187 + $0xc8] sm:$0xff] %v238
                %v240 = vld [vmem:[%s186 + $0x4d0] sm:$0xff]
                %241 = vst [vmem:[%s187 + $0xd0] sm:$0xff] %v240
                %v242 = vld [vmem:[%s186 + $0x4d8] sm:$0xff]
                %243 = vst [vmem:[%s187 + $0xd8] sm:$0xff] %v242
                %v244 = vld [vmem:[%s186 + $0x4e0] sm:$0xff]
                %245 = vst [vmem:[%s187 + $0xe0] sm:$0xff] %v244
                %v246 = vld [vmem:[%s186 + $0x4e8] sm:$0xff]
                %247 = vst [vmem:[%s187 + $0xe8] sm:$0xff] %v246
                %v248 = vld [vmem:[%s186 + $0x4f0] sm:$0xff]
                %249 = vst [vmem:[%s187 + $0xf0] sm:$0xff] %v248
                %v250 = vld [vmem:[%s186 + $0x4f8] sm:$0xff]
                %251 = vst [vmem:[%s187 + $0xf8] sm:$0xff] %v250
              $region41: #{multilayer_forward.1} parent=35 // loop_footer
                %s185 = sadd.s32 1, %s181
              $region42: #{multilayer_forward.1} parent=35 // loop_footer_branch
                %180 = sbr.rel target = $region38
              $region43: #{multilayer_forward.1} parent=35 // loop_exit
                _
            $region36: #{multilayer_forward.1} parent=27 // pred_fallthru
              _
          $region28: #{multilayer_forward.1} parent=23 // pred_fallthru
            _
          %328 = vnop
        $region24: #{multilayer_forward.1} parent=15 // pred_fallthru
          _
        // Predicated region
        $region59: #{multilayer_forward.1} parent=15 // pred_check
          %p329 = pneg %p100
        $region60: #{multilayer_forward.1} parent=15 // pred_check_branch
          %331 = sbr.rel (%p329) target = $region62
        $region61: #{multilayer_forward.1} parent=15 // pred_region
          %s332 = sand.u32 %s90, 1
          %s333 = sand.u32 %s90, 1
          %s334 = smul.addr %s333, 32
          %s335 = scalar_lea.vmem [#allocation3], %s334
          %s336 = smul.addr %s20, 2
          %s337 = smul.addr %s19, 36
          %s338 = sadd.s32 %s336, %s337
          %s339 = smul.addr %s338, 8
          %s340 = scalar_lea.vmem %s2, %s339
          // Predicated region
          $region63: #{multilayer_forward.1} parent=61 // pred_check
            _
          $region64: #{multilayer_forward.1} parent=61 // pred_check_branch
            %342 = sbr.rel (0) target = $region66
          $region65: #{multilayer_forward.1} parent=61 // pred_region
            // Predicated region
            $region67: #{multilayer_forward.1} parent=65 // pred_check
              _
            $region68: #{multilayer_forward.1} parent=65 // pred_check_branch
              %344 = sbr.rel (0) target = $region70
            $region69: #{multilayer_forward.1} parent=65 // pred_region
              // Predicated region
              $region82: #{multilayer_forward.1} parent=69 // pred_check
                _
              $region83: #{multilayer_forward.1} parent=69 // pred_check_branch
                %365 = sbr.rel (0) target = $region85
              $region84: #{multilayer_forward.1} parent=69 // pred_region
                loop: start=0, step=1, limit=1
                $region86: #{multilayer_forward.1} parent=84 // loop_pre_header
                  _
                $region87: #{multilayer_forward.1} parent=84 // loop_header
                  %s367 = sphi 0, %s371
                  %p368 = scmp.ge.s32.totalorder %s367, 1
                  %s372 = sphi %s340, %s340
                  %s373 = sphi %s335, %s335
                $region88: #{multilayer_forward.1} parent=84 // loop_header_branch
                  %370 = sbr.rel (%p368) target = $region92
                $region89: #{multilayer_forward.1} parent=84 // loop_body
                  %v374 = vld [vmem:[%s372] sm:$0xff]
                  %375 = vst [vmem:[%s373] sm:$0xff] %v374
                  %v376 = vld [vmem:[%s372 + $0x8] sm:$0xff]
                  %377 = vst [vmem:[%s373 + $0x8] sm:$0xff] %v376
                  %v378 = vld [vmem:[%s372 + $0x90] sm:$0xff]
                  %379 = vst [vmem:[%s373 + $0x10] sm:$0xff] %v378
                  %v380 = vld [vmem:[%s372 + $0x98] sm:$0xff]
                  %381 = vst [vmem:[%s373 + $0x18] sm:$0xff] %v380
                $region90: #{multilayer_forward.1} parent=84 // loop_footer
                  %s371 = sadd.s32 1, %s367
                $region91: #{multilayer_forward.1} parent=84 // loop_footer_branch
                  %366 = sbr.rel target = $region87
                $region92: #{multilayer_forward.1} parent=84 // loop_exit
                  _
              $region85: #{multilayer_forward.1} parent=69 // pred_fallthru
                _
              // Predicated region
              $region93: #{multilayer_forward.1} parent=69 // pred_check
                _
              $region94: #{multilayer_forward.1} parent=69 // pred_check_branch
                %383 = sbr.rel target = $region96
              $region95: #{multilayer_forward.1} parent=69 // pred_region
                _
              $region96: #{multilayer_forward.1} parent=69 // pred_fallthru
                _
            $region70: #{multilayer_forward.1} parent=65 // pred_fallthru
              _
            // Predicated region
            $region71: #{multilayer_forward.1} parent=65 // pred_check
              _
            $region72: #{multilayer_forward.1} parent=65 // pred_check_branch
              %346 = sbr.rel target = $region74
            $region73: #{multilayer_forward.1} parent=65 // pred_region
              loop: start=0, step=1, limit=1
              $region75: #{multilayer_forward.1} parent=73 // loop_pre_header
                _
              $region76: #{multilayer_forward.1} parent=73 // loop_header
                %s349 = sphi 0, %s353
                %p350 = scmp.ge.s32.totalorder %s349, 1
                %s354 = sphi %s340, %s340
                %s355 = sphi %s335, %s335
              $region77: #{multilayer_forward.1} parent=73 // loop_header_branch
                %352 = sbr.rel (%p350) target = $region81
              $region78: #{multilayer_forward.1} parent=73 // loop_body
                %v356 = vld [vmem:[%s354] sm:$0xff]
                %357 = vst [vmem:[%s355] sm:$0xff] %v356
                %v358 = vld [vmem:[%s354 + $0x8] sm:$0xff]
                %359 = vst [vmem:[%s355 + $0x8] sm:$0xff] %v358
                %v360 = vld [vmem:[%s354 + $0x90] sm:$0xff]
                %361 = vst [vmem:[%s355 + $0x10] sm:$0xff] %v360
                %v362 = vld [vmem:[%s354 + $0x98] sm:$0xff]
                %363 = vst [vmem:[%s355 + $0x18] sm:$0xff] %v362
              $region79: #{multilayer_forward.1} parent=73 // loop_footer
                %s353 = sadd.s32 1, %s349
              $region80: #{multilayer_forward.1} parent=73 // loop_footer_branch
                %348 = sbr.rel target = $region76
              $region81: #{multilayer_forward.1} parent=73 // loop_exit
                _
            $region74: #{multilayer_forward.1} parent=65 // pred_fallthru
              _
          $region66: #{multilayer_forward.1} parent=61 // pred_fallthru
            _
          %384 = vnop
        $region62: #{multilayer_forward.1} parent=15 // pred_fallthru
          _
      $region16: #{multilayer_forward.1} parent=5 // pred_fallthru
        _
      %p385 = scmp.le.s32.totalorder 1, %s12
      %p386 = scmp.lt.s32.totalorder %s12, 19
      %p387 = pnand %p385, %p386
      %p388 = pneg %p387
      // Predicated region
      $region97: #{multilayer_forward.1} parent=5 // pred_check
        _
      $region98: #{multilayer_forward.1} parent=5 // pred_check_branch
        %390 = sbr.rel (%p387) target = $region100
      $region99: #{multilayer_forward.1} parent=5 // pred_region
        %s391 = ssub.s32 %s12, 1
        %s392 = sand.u32 %s65, 1
        %s393 = sand.u32 %s65, 1
        %s394 = smul.addr %s393, 256
        %s395 = scalar_lea.vmem [#allocation2], %s394
        // Predicated region
        $region101: #{multilayer_forward.1} parent=99 // pred_check
          %p396 = pneg %p78
        $region102: #{multilayer_forward.1} parent=99 // pred_check_branch
          %398 = sbr.rel (%p396) target = $region104
        $region103: #{multilayer_forward.1} parent=99 // pred_region
          _
        $region104: #{multilayer_forward.1} parent=99 // pred_fallthru
          _
        %s399 = sand.u32 %s93, 1
        %s400 = sand.u32 %s93, 1
        %s401 = smul.addr %s400, 32
        %s402 = scalar_lea.vmem [#allocation3], %s401
        // Predicated region
        $region105: #{multilayer_forward.1} parent=99 // pred_check
          %p403 = pneg %p106
        $region106: #{multilayer_forward.1} parent=99 // pred_check_branch
          %405 = sbr.rel (%p403) target = $region108
        $region107: #{multilayer_forward.1} parent=99 // pred_region
          _
        $region108: #{multilayer_forward.1} parent=99 // pred_fallthru
          _
        %p406 = scmp.lt.s32.totalorder %s21, 1
        %s407 = scalar_select %p406, %s21, 1
        %s408 = smul.addr %s407, 24
        %s409 = smul.addr %s408, 8
        %s410 = scalar_lea.vmem %s0, %s409
        %p411 = pneg %p50
        %p412 = pneg %p47
        %s413 = sand.u32 %s65, 1
        %s414 = sand.u32 %s65, 1
        %s415 = smul.addr %s414, 256
        %s416 = scalar_lea.vmem [#allocation2], %s415
        %p417 = pneg %p78
        %p418 = pneg %p75
        %s419 = sand.u32 %s93, 1
        %s420 = sand.u32 %s93, 1
        %s421 = smul.addr %s420, 32
        %s422 = scalar_lea.vmem [#allocation3], %s421
        %p423 = pneg %p106
        %p424 = pneg %p103
        %p425 = pneg %p134
        %p426 = pneg %p131
        %s427 = sand.u32 %s121, 1
        %s428 = scalar_lea.sflag [#allocation5], %s427
        %s429 = sand.u32 %s121, 1
        %s430 = smul.addr %s429, 48
        %s431 = scalar_lea.vmem [#allocation4], %s430
        %p432 = scmp.lt.s32.totalorder %s21, 1
        %s433 = scalar_select %p432, %s21, 1
        %s434 = smul.addr %s433, 24
        %s435 = smul.addr %s434, 8
        %s436 = scalar_lea.vmem %s0, %s435
        %v437 = vld [vmem:[%s436] sm:$0xff]
        %v438 = vld [vmem:[%s436 + $0x8] sm:$0xff]
        %v439 = vld [vmem:[%s436 + $0x10] sm:$0xff]
        %v440 = vld [vmem:[%s436 + $0x18] sm:$0xff]
        %v441 = vld [vmem:[%s436 + $0x20] sm:$0xff]
        %v442 = vld [vmem:[%s436 + $0x28] sm:$0xff]
        %v443 = vld [vmem:[%s436 + $0x30] sm:$0xff]
        %v444 = vld [vmem:[%s436 + $0x38] sm:$0xff]
        %v445 = vld [vmem:[%s436 + $0x40] sm:$0xff]
        %v446 = vld [vmem:[%s436 + $0x48] sm:$0xff]
        %v447 = vld [vmem:[%s436 + $0x50] sm:$0xff]
        %v448 = vld [vmem:[%s436 + $0x58] sm:$0xff]
        %v449 = vld [vmem:[%s395] sm:$0xff]
        %v450 = vld [vmem:[%s395 + $0x8] sm:$0xff]
        %v451 = vld [vmem:[%s395 + $0x10] sm:$0xff]
        %v452 = vld [vmem:[%s395 + $0x18] sm:$0xff]
        %v453 = vld [vmem:[%s395 + $0x20] sm:$0xff]
        %v454 = vld [vmem:[%s395 + $0x28] sm:$0xff]
        %v455 = vld [vmem:[%s395 + $0x30] sm:$0xff]
        %v456 = vld [vmem:[%s395 + $0x38] sm:$0xff]
        %v457 = vld [vmem:[%s395 + $0x40] sm:$0xff]
        %v458 = vld [vmem:[%s395 + $0x48] sm:$0xff]
        %v459 = vld [vmem:[%s395 + $0x50] sm:$0xff]
        %v460 = vld [vmem:[%s395 + $0x58] sm:$0xff]
        %v461 = vld [vmem:[%s395 + $0x60] sm:$0xff]
        %v462 = vld [vmem:[%s395 + $0x68] sm:$0xff]
        %v463 = vld [vmem:[%s395 + $0x70] sm:$0xff]
        %v464 = vld [vmem:[%s395 + $0x78] sm:$0xff]
        %v465 = vld [vmem:[%s402] sm:$0xff]
        %v466 = vld [vmem:[%s402 + $0x8] sm:$0xff]
        %467 = vmatprep.subr.mxu0 0.0
        %468 = vmatpush1.msra.mxu0 %v449
        %469 = vmatprep.subr.mxu0 0.0
        %470 = vmatpush1.msra.mxu0 %v450
        %471 = vmatprep.subr.mxu0 0.0
        %472 = vmatpush1.msra.mxu0 %v451
        %473 = vmatprep.subr.mxu0 0.0
        %474 = vmatpush1.msra.mxu0 %v452
        %475 = vmatprep.subr.mxu0 0.0
        %476 = vmatpush1.msra.mxu0 %v453
        %477 = vmatprep.subr.mxu0 0.0
        %478 = vmatpush1.msra.mxu0 %v454
        %479 = vmatprep.subr.mxu0 0.0
        %480 = vmatpush1.msra.mxu0 %v455
        %481 = vmatprep.subr.mxu0 0.0
        %482 = vmatpush1.msra.mxu0 %v456
        %483 = vmatprep.subr.mxu0 0.0
        %484 = vmatpush1.msra.mxu0 %v457
        %485 = vmatprep.subr.mxu0 0.0
        %486 = vmatpush1.msra.mxu0 %v458
        %487 = vmatprep.subr.mxu0 0.0
        %488 = vmatpush1.msra.mxu0 %v459
        %489 = vmatprep.subr.mxu0 0.0
        %490 = vmatpush1.msra.mxu0 %v460
        %491 = vmatprep.subr.mxu0 0.0
        %492 = vmatpush1.msra.mxu0 %v461
        %493 = vmatprep.subr.mxu0 0.0
        %494 = vmatpush1.msra.mxu0 %v462
        %495 = vmatprep.subr.mxu0 0.0
        %496 = vmatpush1.msra.mxu0 %v463
        %497 = vmatprep.subr.mxu0 0.0
        %498 = vmatpush1.msra.mxu0 %v464
        %499 = vmatprep.subr.mxu0 0.0
        %500 = vmatpush1.msra.mxu0 0.0
        %501 = vmatprep.subr.mxu0 0.0
        %502 = vmatpush1.msra.mxu0 0.0
        %503 = vmatprep.subr.mxu0 0.0
        %504 = vmatpush1.msra.mxu0 0.0
        %505 = vmatprep.subr.mxu0 0.0
        %506 = vmatpush1.msra.mxu0 0.0
        %507 = vmatprep.subr.mxu0 0.0
        %508 = vmatpush1.msra.mxu0 0.0
        %509 = vmatprep.subr.mxu0 0.0
        %510 = vmatpush1.msra.mxu0 0.0
        %511 = vmatprep.subr.mxu0 0.0
        %512 = vmatpush1.msra.mxu0 0.0
        %513 = vmatprep.subr.mxu0 0.0
        %514 = vmatpush1.msra.mxu0 0.0
        %515 = vmatprep.subr.mxu0 0.0
        %516 = vmatpush1.msra.mxu0 0.0
        %517 = vmatprep.subr.mxu0 0.0
        %518 = vmatpush1.msra.mxu0 0.0
        %519 = vmatprep.subr.mxu0 0.0
        %520 = vmatpush1.msra.mxu0 0.0
        %521 = vmatprep.subr.mxu0 0.0
        %522 = vmatpush1.msra.mxu0 0.0
        %523 = vmatprep.subr.mxu0 0.0
        %524 = vmatpush1.msra.mxu0 0.0
        %525 = vmatprep.subr.mxu0 0.0
        %526 = vmatpush1.msra.mxu0 0.0
        %527 = vmatprep.subr.mxu0 0.0
        %528 = vmatpush1.msra.mxu0 0.0
        %529 = vmatprep.subr.mxu0 0.0
        %530 = vmatpush1.msra.mxu0 0.0
        %531 = vmatprep.mubr.f32.mxu0 0.0
        %532 = vmatmul.mubr.f32.gmra.mrb[0].mxu0 %v437
        %v533 = vpop.f32.mrb[0].mxu0
        %v534 = vadd.f32 0.0, %v533
        %v535 = vpop.f32.mrb[0].mxu0
        %536 = vmatprep.mubr.f32.mxu0 0.0
        %537 = vmatmul.mubr.f32.gmra.mrb[0].mxu0 %v438
        %v538 = vpop.f32.mrb[0].mxu0
        %v539 = vadd.f32 0.0, %v538
        %v540 = vpop.f32.mrb[0].mxu0
        %541 = vmatprep.mubr.f32.mxu0 0.0
        %542 = vmatmul.mubr.f32.gmra.mrb[0].mxu0 %v439
        %v543 = vpop.f32.mrb[0].mxu0
        %v544 = vadd.f32 0.0, %v543
        %v545 = vpop.f32.mrb[0].mxu0
        %546 = vmatprep.mubr.f32.mxu0 0.0
        %547 = vmatmul.mubr.f32.gmra.mrb[0].mxu0 %v440
        %v548 = vpop.f32.mrb[0].mxu0
        %v549 = vadd.f32 0.0, %v548
        %v550 = vpop.f32.mrb[0].mxu0
        %551 = vmatprep.mubr.f32.mxu0 0.0
        %552 = vmatmul.mubr.f32.gmra.mrb[0].mxu0 %v441
        %v553 = vpop.f32.mrb[0].mxu0
        %v554 = vadd.f32 0.0, %v553
        %v555 = vpop.f32.mrb[0].mxu0
        %556 = vmatprep.mubr.f32.mxu0 0.0
        %557 = vmatmul.mubr.f32.gmra.mrb[0].mxu0 %v442
        %v558 = vpop.f32.mrb[0].mxu0
        %v559 = vadd.f32 0.0, %v558
        %v560 = vpop.f32.mrb[0].mxu0
        %561 = vmatprep.mubr.f32.mxu0 0.0
        %562 = vmatmul.mubr.f32.gmra.mrb[0].mxu0 %v443
        %v563 = vpop.f32.mrb[0].mxu0
        %v564 = vadd.f32 0.0, %v563
        %v565 = vpop.f32.mrb[0].mxu0
        %566 = vmatprep.mubr.f32.mxu0 0.0
        %567 = vmatmul.mubr.f32.gmra.mrb[0].mxu0 %v444
        %v568 = vpop.f32.mrb[0].mxu0
        %v569 = vadd.f32 0.0, %v568
        %v570 = vpop.f32.mrb[0].mxu0
        %571 = vmatprep.mubr.f32.mxu0 0.0
        %572 = vmatmul.mubr.f32.gmra.mrb[0].mxu0 %v445
        %v573 = vpop.f32.mrb[0].mxu0
        %v574 = vadd.f32 0.0, %v573
        %v575 = vpop.f32.mrb[0].mxu0
        %576 = vmatprep.mubr.f32.mxu0 0.0
        %577 = vmatmul.mubr.f32.gmra.mrb[0].mxu0 %v446
        %v578 = vpop.f32.mrb[0].mxu0
        %v579 = vadd.f32 0.0, %v578
        %v580 = vpop.f32.mrb[0].mxu0
        %581 = vmatprep.mubr.f32.mxu0 0.0
        %582 = vmatmul.mubr.f32.gmra.mrb[0].mxu0 %v447
        %v583 = vpop.f32.mrb[0].mxu0
        %v584 = vadd.f32 0.0, %v583
        %v585 = vpop.f32.mrb[0].mxu0
        %586 = vmatprep.mubr.f32.mxu0 0.0
        %587 = vmatmul.mubr.f32.gmra.mrb[0].mxu0 %v448
        %v588 = vpop.f32.mrb[0].mxu0
        %v589 = vadd.f32 0.0, %v588
        %v590 = vpop.f32.mrb[0].mxu0
        %591 = vdwg.mxu0
        %vm592 = vcmask 130048
        %v594 = vsel %vm592, %v465, 0
        %v597 = vsel %vm592, %v466, 0
        %599 = vmatprep.subr.mxu0 0.0
        %600 = vmatpush1.msra.mxu0 %v534
        %601 = vmatprep.subr.mxu0 0.0
        %602 = vmatpush1.msra.mxu0 %v539
        %603 = vmatprep.subr.mxu0 0.0
        %604 = vmatpush1.msra.mxu0 0.0
        %605 = vmatprep.subr.mxu0 0.0
        %606 = vmatpush1.msra.mxu0 0.0
        %607 = vmatprep.subr.mxu0 0.0
        %608 = vmatpush1.msra.mxu0 0.0
        %609 = vmatprep.subr.mxu0 0.0
        %610 = vmatpush1.msra.mxu0 0.0
        %611 = vmatprep.subr.mxu0 0.0
        %612 = vmatpush1.msra.mxu0 0.0
        %613 = vmatprep.subr.mxu0 0.0
        %614 = vmatpush1.msra.mxu0 0.0
        %615 = vmatprep.subr.mxu0 0.0
        %616 = vmatpush1.msra.mxu0 0.0
        %617 = vmatprep.subr.mxu0 0.0
        %618 = vmatpush1.msra.mxu0 0.0
        %619 = vmatprep.subr.mxu0 0.0
        %620 = vmatpush1.msra.mxu0 0.0
        %621 = vmatprep.subr.mxu0 0.0
        %622 = vmatpush1.msra.mxu0 0.0
        %623 = vmatprep.subr.mxu0 0.0
        %624 = vmatpush1.msra.mxu0 0.0
        %625 = vmatprep.subr.mxu0 0.0
        %626 = vmatpush1.msra.mxu0 0.0
        %627 = vmatprep.subr.mxu0 0.0
        %628 = vmatpush1.msra.mxu0 0.0
        %629 = vmatprep.subr.mxu0 0.0
        %630 = vmatpush1.msra.mxu0 0.0
        %631 = vmatprep.subr.mxu0 0.0
        %632 = vmatpush1.msra.mxu0 0.0
        %633 = vmatprep.subr.mxu0 0.0
        %634 = vmatpush1.msra.mxu0 0.0
        %635 = vmatprep.subr.mxu0 0.0
        %636 = vmatpush1.msra.mxu0 0.0
        %637 = vmatprep.subr.mxu0 0.0
        %638 = vmatpush1.msra.mxu0 0.0
        %639 = vmatprep.subr.mxu0 0.0
        %640 = vmatpush1.msra.mxu0 0.0
        %641 = vmatprep.subr.mxu0 0.0
        %642 = vmatpush1.msra.mxu0 0.0
        %643 = vmatprep.subr.mxu0 0.0
        %644 = vmatpush1.msra.mxu0 0.0
        %645 = vmatprep.subr.mxu0 0.0
        %646 = vmatpush1.msra.mxu0 0.0
        %647 = vmatprep.subr.mxu0 0.0
        %648 = vmatpush1.msra.mxu0 0.0
        %649 = vmatprep.subr.mxu0 0.0
        %650 = vmatpush1.msra.mxu0 0.0
        %651 = vmatprep.subr.mxu0 0.0
        %652 = vmatpush1.msra.mxu0 0.0
        %653 = vmatprep.subr.mxu0 0.0
        %654 = vmatpush1.msra.mxu0 0.0
        %655 = vmatprep.subr.mxu0 0.0
        %656 = vmatpush1.msra.mxu0 0.0
        %657 = vmatprep.subr.mxu0 0.0
        %658 = vmatpush1.msra.mxu0 0.0
        %659 = vmatprep.subr.mxu0 0.0
        %660 = vmatpush1.msra.mxu0 0.0
        %661 = vmatprep.subr.mxu0 0.0
        %662 = vmatpush1.msra.mxu0 0.0
        %663 = vmatprep.mubr.f32.mxu0 0.0
        %664 = vmatmul.mubr.f32.gmra.mrb[0].mxu0 %v594
        %v665 = vpop.f32.mrb[0].mxu0
        %v666 = vadd.f32 0.0, %v665
        %v667 = vpop.f32.mrb[0].mxu0
        %668 = vmatprep.mubr.f32.mxu0 0.0
        %669 = vmatmul.mubr.f32.gmra.mrb[0].mxu0 %v597
        %v670 = vpop.f32.mrb[0].mxu0
        %v671 = vadd.f32 0.0, %v670
        %v672 = vpop.f32.mrb[0].mxu0
        %673 = vdwg.mxu0
        %674 = vmatprep.subr.mxu0 0.0
        %675 = vmatpush1.msra.mxu0 %v544
        %676 = vmatprep.subr.mxu0 0.0
        %677 = vmatpush1.msra.mxu0 %v549
        %678 = vmatprep.subr.mxu0 0.0
        %679 = vmatpush1.msra.mxu0 0.0
        %680 = vmatprep.subr.mxu0 0.0
        %681 = vmatpush1.msra.mxu0 0.0
        %682 = vmatprep.subr.mxu0 0.0
        %683 = vmatpush1.msra.mxu0 0.0
        %684 = vmatprep.subr.mxu0 0.0
        %685 = vmatpush1.msra.mxu0 0.0
        %686 = vmatprep.subr.mxu0 0.0
        %687 = vmatpush1.msra.mxu0 0.0
        %688 = vmatprep.subr.mxu0 0.0
        %689 = vmatpush1.msra.mxu0 0.0
        %690 = vmatprep.subr.mxu0 0.0
        %691 = vmatpush1.msra.mxu0 0.0
        %692 = vmatprep.subr.mxu0 0.0
        %693 = vmatpush1.msra.mxu0 0.0
        %694 = vmatprep.subr.mxu0 0.0
        %695 = vmatpush1.msra.mxu0 0.0
        %696 = vmatprep.subr.mxu0 0.0
        %697 = vmatpush1.msra.mxu0 0.0
        %698 = vmatprep.subr.mxu0 0.0
        %699 = vmatpush1.msra.mxu0 0.0
        %700 = vmatprep.subr.mxu0 0.0
        %701 = vmatpush1.msra.mxu0 0.0
        %702 = vmatprep.subr.mxu0 0.0
        %703 = vmatpush1.msra.mxu0 0.0
        %704 = vmatprep.subr.mxu0 0.0
        %705 = vmatpush1.msra.mxu0 0.0
        %706 = vmatprep.subr.mxu0 0.0
        %707 = vmatpush1.msra.mxu0 0.0
        %708 = vmatprep.subr.mxu0 0.0
        %709 = vmatpush1.msra.mxu0 0.0
        %710 = vmatprep.subr.mxu0 0.0
        %711 = vmatpush1.msra.mxu0 0.0
        %712 = vmatprep.subr.mxu0 0.0
        %713 = vmatpush1.msra.mxu0 0.0
        %714 = vmatprep.subr.mxu0 0.0
        %715 = vmatpush1.msra.mxu0 0.0
        %716 = vmatprep.subr.mxu0 0.0
        %717 = vmatpush1.msra.mxu0 0.0
        %718 = vmatprep.subr.mxu0 0.0
        %719 = vmatpush1.msra.mxu0 0.0
        %720 = vmatprep.subr.mxu0 0.0
        %721 = vmatpush1.msra.mxu0 0.0
        %722 = vmatprep.subr.mxu0 0.0
        %723 = vmatpush1.msra.mxu0 0.0
        %724 = vmatprep.subr.mxu0 0.0
        %725 = vmatpush1.msra.mxu0 0.0
        %726 = vmatprep.subr.mxu0 0.0
        %727 = vmatpush1.msra.mxu0 0.0
        %728 = vmatprep.subr.mxu0 0.0
        %729 = vmatpush1.msra.mxu0 0.0
        %730 = vmatprep.subr.mxu0 0.0
        %731 = vmatpush1.msra.mxu0 0.0
        %732 = vmatprep.subr.mxu0 0.0
        %733 = vmatpush1.msra.mxu0 0.0
        %734 = vmatprep.subr.mxu0 0.0
        %735 = vmatpush1.msra.mxu0 0.0
        %736 = vmatprep.subr.mxu0 0.0
        %737 = vmatpush1.msra.mxu0 0.0
        %738 = vmatprep.mubr.f32.mxu0 0.0
        %739 = vmatmul.mubr.f32.gmra.mrb[0].mxu0 %v594
        %v740 = vpop.f32.mrb[0].mxu0
        %v741 = vadd.f32 0.0, %v740
        %v742 = vpop.f32.mrb[0].mxu0
        %743 = vmatprep.mubr.f32.mxu0 0.0
        %744 = vmatmul.mubr.f32.gmra.mrb[0].mxu0 %v597
        %v745 = vpop.f32.mrb[0].mxu0
        %v746 = vadd.f32 0.0, %v745
        %v747 = vpop.f32.mrb[0].mxu0
        %748 = vdwg.mxu0
        %749 = vmatprep.subr.mxu0 0.0
        %750 = vmatpush1.msra.mxu0 %v554
        %751 = vmatprep.subr.mxu0 0.0
        %752 = vmatpush1.msra.mxu0 %v559
        %753 = vmatprep.subr.mxu0 0.0
        %754 = vmatpush1.msra.mxu0 0.0
        %755 = vmatprep.subr.mxu0 0.0
        %756 = vmatpush1.msra.mxu0 0.0
        %757 = vmatprep.subr.mxu0 0.0
        %758 = vmatpush1.msra.mxu0 0.0
        %759 = vmatprep.subr.mxu0 0.0
        %760 = vmatpush1.msra.mxu0 0.0
        %761 = vmatprep.subr.mxu0 0.0
        %762 = vmatpush1.msra.mxu0 0.0
        %763 = vmatprep.subr.mxu0 0.0
        %764 = vmatpush1.msra.mxu0 0.0
        %765 = vmatprep.subr.mxu0 0.0
        %766 = vmatpush1.msra.mxu0 0.0
        %767 = vmatprep.subr.mxu0 0.0
        %768 = vmatpush1.msra.mxu0 0.0
        %769 = vmatprep.subr.mxu0 0.0
        %770 = vmatpush1.msra.mxu0 0.0
        %771 = vmatprep.subr.mxu0 0.0
        %772 = vmatpush1.msra.mxu0 0.0
        %773 = vmatprep.subr.mxu0 0.0
        %774 = vmatpush1.msra.mxu0 0.0
        %775 = vmatprep.subr.mxu0 0.0
        %776 = vmatpush1.msra.mxu0 0.0
        %777 = vmatprep.subr.mxu0 0.0
        %778 = vmatpush1.msra.mxu0 0.0
        %779 = vmatprep.subr.mxu0 0.0
        %780 = vmatpush1.msra.mxu0 0.0
        %781 = vmatprep.subr.mxu0 0.0
        %782 = vmatpush1.msra.mxu0 0.0
        %783 = vmatprep.subr.mxu0 0.0
        %784 = vmatpush1.msra.mxu0 0.0
        %785 = vmatprep.subr.mxu0 0.0
        %786 = vmatpush1.msra.mxu0 0.0
        %787 = vmatprep.subr.mxu0 0.0
        %788 = vmatpush1.msra.mxu0 0.0
        %789 = vmatprep.subr.mxu0 0.0
        %790 = vmatpush1.msra.mxu0 0.0
        %791 = vmatprep.subr.mxu0 0.0
        %792 = vmatpush1.msra.mxu0 0.0
        %793 = vmatprep.subr.mxu0 0.0
        %794 = vmatpush1.msra.mxu0 0.0
        %795 = vmatprep.subr.mxu0 0.0
        %796 = vmatpush1.msra.mxu0 0.0
        %797 = vmatprep.subr.mxu0 0.0
        %798 = vmatpush1.msra.mxu0 0.0
        %799 = vmatprep.subr.mxu0 0.0
        %800 = vmatpush1.msra.mxu0 0.0
        %801 = vmatprep.subr.mxu0 0.0
        %802 = vmatpush1.msra.mxu0 0.0
        %803 = vmatprep.subr.mxu0 0.0
        %804 = vmatpush1.msra.mxu0 0.0
        %805 = vmatprep.subr.mxu0 0.0
        %806 = vmatpush1.msra.mxu0 0.0
        %807 = vmatprep.subr.mxu0 0.0
        %808 = vmatpush1.msra.mxu0 0.0
        %809 = vmatprep.subr.mxu0 0.0
        %810 = vmatpush1.msra.mxu0 0.0
        %811 = vmatprep.subr.mxu0 0.0
        %812 = vmatpush1.msra.mxu0 0.0
        %813 = vmatprep.mubr.f32.mxu0 0.0
        %814 = vmatmul.mubr.f32.gmra.mrb[0].mxu0 %v594
        %v815 = vpop.f32.mrb[0].mxu0
        %v816 = vadd.f32 0.0, %v815
        %v817 = vpop.f32.mrb[0].mxu0
        %818 = vmatprep.mubr.f32.mxu0 0.0
        %819 = vmatmul.mubr.f32.gmra.mrb[0].mxu0 %v597
        %v820 = vpop.f32.mrb[0].mxu0
        %v821 = vadd.f32 0.0, %v820
        %v822 = vpop.f32.mrb[0].mxu0
        %823 = vdwg.mxu0
        %824 = vmatprep.subr.mxu0 0.0
        %825 = vmatpush1.msra.mxu0 %v564
        %826 = vmatprep.subr.mxu0 0.0
        %827 = vmatpush1.msra.mxu0 %v569
        %828 = vmatprep.subr.mxu0 0.0
        %829 = vmatpush1.msra.mxu0 0.0
        %830 = vmatprep.subr.mxu0 0.0
        %831 = vmatpush1.msra.mxu0 0.0
        %832 = vmatprep.subr.mxu0 0.0
        %833 = vmatpush1.msra.mxu0 0.0
        %834 = vmatprep.subr.mxu0 0.0
        %835 = vmatpush1.msra.mxu0 0.0
        %836 = vmatprep.subr.mxu0 0.0
        %837 = vmatpush1.msra.mxu0 0.0
        %838 = vmatprep.subr.mxu0 0.0
        %839 = vmatpush1.msra.mxu0 0.0
        %840 = vmatprep.subr.mxu0 0.0
        %841 = vmatpush1.msra.mxu0 0.0
        %842 = vmatprep.subr.mxu0 0.0
        %843 = vmatpush1.msra.mxu0 0.0
        %844 = vmatprep.subr.mxu0 0.0
        %845 = vmatpush1.msra.mxu0 0.0
        %846 = vmatprep.subr.mxu0 0.0
        %847 = vmatpush1.msra.mxu0 0.0
        %848 = vmatprep.subr.mxu0 0.0
        %849 = vmatpush1.msra.mxu0 0.0
        %850 = vmatprep.subr.mxu0 0.0
        %851 = vmatpush1.msra.mxu0 0.0
        %852 = vmatprep.subr.mxu0 0.0
        %853 = vmatpush1.msra.mxu0 0.0
        %854 = vmatprep.subr.mxu0 0.0
        %855 = vmatpush1.msra.mxu0 0.0
        %856 = vmatprep.subr.mxu0 0.0
        %857 = vmatpush1.msra.mxu0 0.0
        %858 = vmatprep.subr.mxu0 0.0
        %859 = vmatpush1.msra.mxu0 0.0
        %860 = vmatprep.subr.mxu0 0.0
        %861 = vmatpush1.msra.mxu0 0.0
        %862 = vmatprep.subr.mxu0 0.0
        %863 = vmatpush1.msra.mxu0 0.0
        %864 = vmatprep.subr.mxu0 0.0
        %865 = vmatpush1.msra.mxu0 0.0
        %866 = vmatprep.subr.mxu0 0.0
        %867 = vmatpush1.msra.mxu0 0.0
        %868 = vmatprep.subr.mxu0 0.0
        %869 = vmatpush1.msra.mxu0 0.0
        %870 = vmatprep.subr.mxu0 0.0
        %871 = vmatpush1.msra.mxu0 0.0
        %872 = vmatprep.subr.mxu0 0.0
        %873 = vmatpush1.msra.mxu0 0.0
        %874 = vmatprep.subr.mxu0 0.0
        %875 = vmatpush1.msra.mxu0 0.0
        %876 = vmatprep.subr.mxu0 0.0
        %877 = vmatpush1.msra.mxu0 0.0
        %878 = vmatprep.subr.mxu0 0.0
        %879 = vmatpush1.msra.mxu0 0.0
        %880 = vmatprep.subr.mxu0 0.0
        %881 = vmatpush1.msra.mxu0 0.0
        %882 = vmatprep.subr.mxu0 0.0
        %883 = vmatpush1.msra.mxu0 0.0
        %884 = vmatprep.subr.mxu0 0.0
        %885 = vmatpush1.msra.mxu0 0.0
        %886 = vmatprep.subr.mxu0 0.0
        %887 = vmatpush1.msra.mxu0 0.0
        %888 = vmatprep.mubr.f32.mxu0 0.0
        %889 = vmatmul.mubr.f32.gmra.mrb[0].mxu0 %v594
        %v890 = vpop.f32.mrb[0].mxu0
        %v891 = vadd.f32 0.0, %v890
        %v892 = vpop.f32.mrb[0].mxu0
        %893 = vmatprep.mubr.f32.mxu0 0.0
        %894 = vmatmul.mubr.f32.gmra.mrb[0].mxu0 %v597
        %v895 = vpop.f32.mrb[0].mxu0
        %v896 = vadd.f32 0.0, %v895
        %v897 = vpop.f32.mrb[0].mxu0
        %898 = vdwg.mxu0
        %899 = vmatprep.subr.mxu0 0.0
        %900 = vmatpush1.msra.mxu0 %v574
        %901 = vmatprep.subr.mxu0 0.0
        %902 = vmatpush1.msra.mxu0 %v579
        %903 = vmatprep.subr.mxu0 0.0
        %904 = vmatpush1.msra.mxu0 0.0
        %905 = vmatprep.subr.mxu0 0.0
        %906 = vmatpush1.msra.mxu0 0.0
        %907 = vmatprep.subr.mxu0 0.0
        %908 = vmatpush1.msra.mxu0 0.0
        %909 = vmatprep.subr.mxu0 0.0
        %910 = vmatpush1.msra.mxu0 0.0
        %911 = vmatprep.subr.mxu0 0.0
        %912 = vmatpush1.msra.mxu0 0.0
        %913 = vmatprep.subr.mxu0 0.0
        %914 = vmatpush1.msra.mxu0 0.0
        %915 = vmatprep.subr.mxu0 0.0
        %916 = vmatpush1.msra.mxu0 0.0
        %917 = vmatprep.subr.mxu0 0.0
        %918 = vmatpush1.msra.mxu0 0.0
        %919 = vmatprep.subr.mxu0 0.0
        %920 = vmatpush1.msra.mxu0 0.0
        %921 = vmatprep.subr.mxu0 0.0
        %922 = vmatpush1.msra.mxu0 0.0
        %923 = vmatprep.subr.mxu0 0.0
        %924 = vmatpush1.msra.mxu0 0.0
        %925 = vmatprep.subr.mxu0 0.0
        %926 = vmatpush1.msra.mxu0 0.0
        %927 = vmatprep.subr.mxu0 0.0
        %928 = vmatpush1.msra.mxu0 0.0
        %929 = vmatprep.subr.mxu0 0.0
        %930 = vmatpush1.msra.mxu0 0.0
        %931 = vmatprep.subr.mxu0 0.0
        %932 = vmatpush1.msra.mxu0 0.0
        %933 = vmatprep.subr.mxu0 0.0
        %934 = vmatpush1.msra.mxu0 0.0
        %935 = vmatprep.subr.mxu0 0.0
        %936 = vmatpush1.msra.mxu0 0.0
        %937 = vmatprep.subr.mxu0 0.0
        %938 = vmatpush1.msra.mxu0 0.0
        %939 = vmatprep.subr.mxu0 0.0
        %940 = vmatpush1.msra.mxu0 0.0
        %941 = vmatprep.subr.mxu0 0.0
        %942 = vmatpush1.msra.mxu0 0.0
        %943 = vmatprep.subr.mxu0 0.0
        %944 = vmatpush1.msra.mxu0 0.0
        %945 = vmatprep.subr.mxu0 0.0
        %946 = vmatpush1.msra.mxu0 0.0
        %947 = vmatprep.subr.mxu0 0.0
        %948 = vmatpush1.msra.mxu0 0.0
        %949 = vmatprep.subr.mxu0 0.0
        %950 = vmatpush1.msra.mxu0 0.0
        %951 = vmatprep.subr.mxu0 0.0
        %952 = vmatpush1.msra.mxu0 0.0
        %953 = vmatprep.subr.mxu0 0.0
        %954 = vmatpush1.msra.mxu0 0.0
        %955 = vmatprep.subr.mxu0 0.0
        %956 = vmatpush1.msra.mxu0 0.0
        %957 = vmatprep.subr.mxu0 0.0
        %958 = vmatpush1.msra.mxu0 0.0
        %959 = vmatprep.subr.mxu0 0.0
        %960 = vmatpush1.msra.mxu0 0.0
        %961 = vmatprep.subr.mxu0 0.0
        %962 = vmatpush1.msra.mxu0 0.0
        %963 = vmatprep.mubr.f32.mxu0 0.0
        %964 = vmatmul.mubr.f32.gmra.mrb[0].mxu0 %v594
        %v965 = vpop.f32.mrb[0].mxu0
        %v966 = vadd.f32 0.0, %v965
        %v967 = vpop.f32.mrb[0].mxu0
        %968 = vmatprep.mubr.f32.mxu0 0.0
        %969 = vmatmul.mubr.f32.gmra.mrb[0].mxu0 %v597
        %v970 = vpop.f32.mrb[0].mxu0
        %v971 = vadd.f32 0.0, %v970
        %v972 = vpop.f32.mrb[0].mxu0
        %973 = vdwg.mxu0
        %974 = vmatprep.subr.mxu0 0.0
        %975 = vmatpush1.msra.mxu0 %v584
        %976 = vmatprep.subr.mxu0 0.0
        %977 = vmatpush1.msra.mxu0 %v589
        %978 = vmatprep.subr.mxu0 0.0
        %979 = vmatpush1.msra.mxu0 0.0
        %980 = vmatprep.subr.mxu0 0.0
        %981 = vmatpush1.msra.mxu0 0.0
        %982 = vmatprep.subr.mxu0 0.0
        %983 = vmatpush1.msra.mxu0 0.0
        %984 = vmatprep.subr.mxu0 0.0
        %985 = vmatpush1.msra.mxu0 0.0
        %986 = vmatprep.subr.mxu0 0.0
        %987 = vmatpush1.msra.mxu0 0.0
        %988 = vmatprep.subr.mxu0 0.0
        %989 = vmatpush1.msra.mxu0 0.0
        %990 = vmatprep.subr.mxu0 0.0
        %991 = vmatpush1.msra.mxu0 0.0
        %992 = vmatprep.subr.mxu0 0.0
        %993 = vmatpush1.msra.mxu0 0.0
        %994 = vmatprep.subr.mxu0 0.0
        %995 = vmatpush1.msra.mxu0 0.0
        %996 = vmatprep.subr.mxu0 0.0
        %997 = vmatpush1.msra.mxu0 0.0
        %998 = vmatprep.subr.mxu0 0.0
        %999 = vmatpush1.msra.mxu0 0.0
        %1000 = vmatprep.subr.mxu0 0.0
        %1001 = vmatpush1.msra.mxu0 0.0
        %1002 = vmatprep.subr.mxu0 0.0
        %1003 = vmatpush1.msra.mxu0 0.0
        %1004 = vmatprep.subr.mxu0 0.0
        %1005 = vmatpush1.msra.mxu0 0.0
        %1006 = vmatprep.subr.mxu0 0.0
        %1007 = vmatpush1.msra.mxu0 0.0
        %1008 = vmatprep.subr.mxu0 0.0
        %1009 = vmatpush1.msra.mxu0 0.0
        %1010 = vmatprep.subr.mxu0 0.0
        %1011 = vmatpush1.msra.mxu0 0.0
        %1012 = vmatprep.subr.mxu0 0.0
        %1013 = vmatpush1.msra.mxu0 0.0
        %1014 = vmatprep.subr.mxu0 0.0
        %1015 = vmatpush1.msra.mxu0 0.0
        %1016 = vmatprep.subr.mxu0 0.0
        %1017 = vmatpush1.msra.mxu0 0.0
        %1018 = vmatprep.subr.mxu0 0.0
        %1019 = vmatpush1.msra.mxu0 0.0
        %1020 = vmatprep.subr.mxu0 0.0
        %1021 = vmatpush1.msra.mxu0 0.0
        %1022 = vmatprep.subr.mxu0 0.0
        %1023 = vmatpush1.msra.mxu0 0.0
        %1024 = vmatprep.subr.mxu0 0.0
        %1025 = vmatpush1.msra.mxu0 0.0
        %1026 = vmatprep.subr.mxu0 0.0
        %1027 = vmatpush1.msra.mxu0 0.0
        %1028 = vmatprep.subr.mxu0 0.0
        %1029 = vmatpush1.msra.mxu0 0.0
        %1030 = vmatprep.subr.mxu0 0.0
        %1031 = vmatpush1.msra.mxu0 0.0
        %1032 = vmatprep.subr.mxu0 0.0
        %1033 = vmatpush1.msra.mxu0 0.0
        %1034 = vmatprep.subr.mxu0 0.0
        %1035 = vmatpush1.msra.mxu0 0.0
        %1036 = vmatprep.subr.mxu0 0.0
        %1037 = vmatpush1.msra.mxu0 0.0
        %1038 = vmatprep.mubr.f32.mxu0 0.0
        %1039 = vmatmul.mubr.f32.gmra.mrb[0].mxu0 %v594
        %v1040 = vpop.f32.mrb[0].mxu0
        %v1041 = vadd.f32 0.0, %v1040
        %v1042 = vpop.f32.mrb[0].mxu0
        %1043 = vmatprep.mubr.f32.mxu0 0.0
        %1044 = vmatmul.mubr.f32.gmra.mrb[0].mxu0 %v597
        %v1045 = vpop.f32.mrb[0].mxu0
        %v1046 = vadd.f32 0.0, %v1045
        %v1047 = vpop.f32.mrb[0].mxu0
        %1048 = vdwg.mxu0
        %s1049 = scalar_lea.vmem %s436, 96
        %v1050 = vld [vmem:[%s1049] sm:$0xff]
        %v1051 = vld [vmem:[%s1049 + $0x8] sm:$0xff]
        %v1052 = vld [vmem:[%s1049 + $0x10] sm:$0xff]
        %v1053 = vld [vmem:[%s1049 + $0x18] sm:$0xff]
        %v1054 = vld [vmem:[%s1049 + $0x20] sm:$0xff]
        %v1055 = vld [vmem:[%s1049 + $0x28] sm:$0xff]
        %v1056 = vld [vmem:[%s1049 + $0x30] sm:$0xff]
        %v1057 = vld [vmem:[%s1049 + $0x38] sm:$0xff]
        %v1058 = vld [vmem:[%s1049 + $0x40] sm:$0xff]
        %v1059 = vld [vmem:[%s1049 + $0x48] sm:$0xff]
        %v1060 = vld [vmem:[%s1049 + $0x50] sm:$0xff]
        %v1061 = vld [vmem:[%s1049 + $0x58] sm:$0xff]
        %s1062 = scalar_lea.vmem %s395, 128 [#allocation2]
        %v1063 = vld [vmem:[%s1062] sm:$0xff]
        %v1064 = vld [vmem:[%s1062 + $0x8] sm:$0xff]
        %v1065 = vld [vmem:[%s1062 + $0x10] sm:$0xff]
        %v1066 = vld [vmem:[%s1062 + $0x18] sm:$0xff]
        %v1067 = vld [vmem:[%s1062 + $0x20] sm:$0xff]
        %v1068 = vld [vmem:[%s1062 + $0x28] sm:$0xff]
        %v1069 = vld [vmem:[%s1062 + $0x30] sm:$0xff]
        %v1070 = vld [vmem:[%s1062 + $0x38] sm:$0xff]
        %v1071 = vld [vmem:[%s1062 + $0x40] sm:$0xff]
        %v1072 = vld [vmem:[%s1062 + $0x48] sm:$0xff]
        %v1073 = vld [vmem:[%s1062 + $0x50] sm:$0xff]
        %v1074 = vld [vmem:[%s1062 + $0x58] sm:$0xff]
        %v1075 = vld [vmem:[%s1062 + $0x60] sm:$0xff]
        %v1076 = vld [vmem:[%s1062 + $0x68] sm:$0xff]
        %v1077 = vld [vmem:[%s1062 + $0x70] sm:$0xff]
        %v1078 = vld [vmem:[%s1062 + $0x78] sm:$0xff]
        %s1079 = scalar_lea.vmem %s402, 16 [#allocation3]
        %v1080 = vld [vmem:[%s1079] sm:$0xff]
        %v1081 = vld [vmem:[%s1079 + $0x8] sm:$0xff]
        %1082 = vmatprep.subr.mxu0 0.0
        %1083 = vmatpush1.msra.mxu0 %v1063
        %1084 = vmatprep.subr.mxu0 0.0
        %1085 = vmatpush1.msra.mxu0 %v1064
        %1086 = vmatprep.subr.mxu0 0.0
        %1087 = vmatpush1.msra.mxu0 %v1065
        %1088 = vmatprep.subr.mxu0 0.0
        %1089 = vmatpush1.msra.mxu0 %v1066
        %1090 = vmatprep.subr.mxu0 0.0
        %1091 = vmatpush1.msra.mxu0 %v1067
        %1092 = vmatprep.subr.mxu0 0.0
        %1093 = vmatpush1.msra.mxu0 %v1068
        %1094 = vmatprep.subr.mxu0 0.0
        %1095 = vmatpush1.msra.mxu0 %v1069
        %1096 = vmatprep.subr.mxu0 0.0
        %1097 = vmatpush1.msra.mxu0 %v1070
        %1098 = vmatprep.subr.mxu0 0.0
        %1099 = vmatpush1.msra.mxu0 %v1071
        %1100 = vmatprep.subr.mxu0 0.0
        %1101 = vmatpush1.msra.mxu0 %v1072
        %1102 = vmatprep.subr.mxu0 0.0
        %1103 = vmatpush1.msra.mxu0 %v1073
        %1104 = vmatprep.subr.mxu0 0.0
        %1105 = vmatpush1.msra.mxu0 %v1074
        %1106 = vmatprep.subr.mxu0 0.0
        %1107 = vmatpush1.msra.mxu0 %v1075
        %1108 = vmatprep.subr.mxu0 0.0
        %1109 = vmatpush1.msra.mxu0 %v1076
        %1110 = vmatprep.subr.mxu0 0.0
        %1111 = vmatpush1.msra.mxu0 %v1077
        %1112 = vmatprep.subr.mxu0 0.0
        %1113 = vmatpush1.msra.mxu0 %v1078
        %1114 = vmatprep.subr.mxu0 0.0
        %1115 = vmatpush1.msra.mxu0 0.0
        %1116 = vmatprep.subr.mxu0 0.0
        %1117 = vmatpush1.msra.mxu0 0.0
        %1118 = vmatprep.subr.mxu0 0.0
        %1119 = vmatpush1.msra.mxu0 0.0
        %1120 = vmatprep.subr.mxu0 0.0
        %1121 = vmatpush1.msra.mxu0 0.0
        %1122 = vmatprep.subr.mxu0 0.0
        %1123 = vmatpush1.msra.mxu0 0.0
        %1124 = vmatprep.subr.mxu0 0.0
        %1125 = vmatpush1.msra.mxu0 0.0
        %1126 = vmatprep.subr.mxu0 0.0
        %1127 = vmatpush1.msra.mxu0 0.0
        %1128 = vmatprep.subr.mxu0 0.0
        %1129 = vmatpush1.msra.mxu0 0.0
        %1130 = vmatprep.subr.mxu0 0.0
        %1131 = vmatpush1.msra.mxu0 0.0
        %1132 = vmatprep.subr.mxu0 0.0
        %1133 = vmatpush1.msra.mxu0 0.0
        %1134 = vmatprep.subr.mxu0 0.0
        %1135 = vmatpush1.msra.mxu0 0.0
        %1136 = vmatprep.subr.mxu0 0.0
        %1137 = vmatpush1.msra.mxu0 0.0
        %1138 = vmatprep.subr.mxu0 0.0
        %1139 = vmatpush1.msra.mxu0 0.0
        %1140 = vmatprep.subr.mxu0 0.0
        %1141 = vmatpush1.msra.mxu0 0.0
        %1142 = vmatprep.subr.mxu0 0.0
        %1143 = vmatpush1.msra.mxu0 0.0
        %1144 = vmatprep.subr.mxu0 0.0
        %1145 = vmatpush1.msra.mxu0 0.0
        %1146 = vmatprep.mubr.f32.mxu0 0.0
        %1147 = vmatmul.mubr.f32.gmra.mrb[0].mxu0 %v1050
        %v1148 = vpop.f32.mrb[0].mxu0
        %v1149 = vadd.f32 0.0, %v1148
        %v1150 = vpop.f32.mrb[0].mxu0
        %1151 = vmatprep.mubr.f32.mxu0 0.0
        %1152 = vmatmul.mubr.f32.gmra.mrb[0].mxu0 %v1051
        %v1153 = vpop.f32.mrb[0].mxu0
        %v1154 = vadd.f32 0.0, %v1153
        %v1155 = vpop.f32.mrb[0].mxu0
        %1156 = vmatprep.mubr.f32.mxu0 0.0
        %1157 = vmatmul.mubr.f32.gmra.mrb[0].mxu0 %v1052
        %v1158 = vpop.f32.mrb[0].mxu0
        %v1159 = vadd.f32 0.0, %v1158
        %v1160 = vpop.f32.mrb[0].mxu0
        %1161 = vmatprep.mubr.f32.mxu0 0.0
        %1162 = vmatmul.mubr.f32.gmra.mrb[0].mxu0 %v1053
        %v1163 = vpop.f32.mrb[0].mxu0
        %v1164 = vadd.f32 0.0, %v1163
        %v1165 = vpop.f32.mrb[0].mxu0
        %1166 = vmatprep.mubr.f32.mxu0 0.0
        %1167 = vmatmul.mubr.f32.gmra.mrb[0].mxu0 %v1054
        %v1168 = vpop.f32.mrb[0].mxu0
        %v1169 = vadd.f32 0.0, %v1168
        %v1170 = vpop.f32.mrb[0].mxu0
        %1171 = vmatprep.mubr.f32.mxu0 0.0
        %1172 = vmatmul.mubr.f32.gmra.mrb[0].mxu0 %v1055
        %v1173 = vpop.f32.mrb[0].mxu0
        %v1174 = vadd.f32 0.0, %v1173
        %v1175 = vpop.f32.mrb[0].mxu0
        %1176 = vmatprep.mubr.f32.mxu0 0.0
        %1177 = vmatmul.mubr.f32.gmra.mrb[0].mxu0 %v1056
        %v1178 = vpop.f32.mrb[0].mxu0
        %v1179 = vadd.f32 0.0, %v1178
        %v1180 = vpop.f32.mrb[0].mxu0
        %1181 = vmatprep.mubr.f32.mxu0 0.0
        %1182 = vmatmul.mubr.f32.gmra.mrb[0].mxu0 %v1057
        %v1183 = vpop.f32.mrb[0].mxu0
        %v1184 = vadd.f32 0.0, %v1183
        %v1185 = vpop.f32.mrb[0].mxu0
        %1186 = vmatprep.mubr.f32.mxu0 0.0
        %1187 = vmatmul.mubr.f32.gmra.mrb[0].mxu0 %v1058
        %v1188 = vpop.f32.mrb[0].mxu0
        %v1189 = vadd.f32 0.0, %v1188
        %v1190 = vpop.f32.mrb[0].mxu0
        %1191 = vmatprep.mubr.f32.mxu0 0.0
        %1192 = vmatmul.mubr.f32.gmra.mrb[0].mxu0 %v1059
        %v1193 = vpop.f32.mrb[0].mxu0
        %v1194 = vadd.f32 0.0, %v1193
        %v1195 = vpop.f32.mrb[0].mxu0
        %1196 = vmatprep.mubr.f32.mxu0 0.0
        %1197 = vmatmul.mubr.f32.gmra.mrb[0].mxu0 %v1060
        %v1198 = vpop.f32.mrb[0].mxu0
        %v1199 = vadd.f32 0.0, %v1198
        %v1200 = vpop.f32.mrb[0].mxu0
        %1201 = vmatprep.mubr.f32.mxu0 0.0
        %1202 = vmatmul.mubr.f32.gmra.mrb[0].mxu0 %v1061
        %v1203 = vpop.f32.mrb[0].mxu0
        %v1204 = vadd.f32 0.0, %v1203
        %v1205 = vpop.f32.mrb[0].mxu0
        %1206 = vdwg.mxu0
        %v1208 = vsel %vm592, %v1080, 0
        %v1211 = vsel %vm592, %v1081, 0
        %1213 = vmatprep.subr.mxu0 0.0
        %1214 = vmatpush1.msra.mxu0 %v1149
        %1215 = vmatprep.subr.mxu0 0.0
        %1216 = vmatpush1.msra.mxu0 %v1154
        %1217 = vmatprep.subr.mxu0 0.0
        %1218 = vmatpush1.msra.mxu0 0.0
        %1219 = vmatprep.subr.mxu0 0.0
        %1220 = vmatpush1.msra.mxu0 0.0
        %1221 = vmatprep.subr.mxu0 0.0
        %1222 = vmatpush1.msra.mxu0 0.0
        %1223 = vmatprep.subr.mxu0 0.0
        %1224 = vmatpush1.msra.mxu0 0.0
        %1225 = vmatprep.subr.mxu0 0.0
        %1226 = vmatpush1.msra.mxu0 0.0
        %1227 = vmatprep.subr.mxu0 0.0
        %1228 = vmatpush1.msra.mxu0 0.0
        %1229 = vmatprep.subr.mxu0 0.0
        %1230 = vmatpush1.msra.mxu0 0.0
        %1231 = vmatprep.subr.mxu0 0.0
        %1232 = vmatpush1.msra.mxu0 0.0
        %1233 = vmatprep.subr.mxu0 0.0
        %1234 = vmatpush1.msra.mxu0 0.0
        %1235 = vmatprep.subr.mxu0 0.0
        %1236 = vmatpush1.msra.mxu0 0.0
        %1237 = vmatprep.subr.mxu0 0.0
        %1238 = vmatpush1.msra.mxu0 0.0
        %1239 = vmatprep.subr.mxu0 0.0
        %1240 = vmatpush1.msra.mxu0 0.0
        %1241 = vmatprep.subr.mxu0 0.0
        %1242 = vmatpush1.msra.mxu0 0.0
        %1243 = vmatprep.subr.mxu0 0.0
        %1244 = vmatpush1.msra.mxu0 0.0
        %1245 = vmatprep.subr.mxu0 0.0
        %1246 = vmatpush1.msra.mxu0 0.0
        %1247 = vmatprep.subr.mxu0 0.0
        %1248 = vmatpush1.msra.mxu0 0.0
        %1249 = vmatprep.subr.mxu0 0.0
        %1250 = vmatpush1.msra.mxu0 0.0
        %1251 = vmatprep.subr.mxu0 0.0
        %1252 = vmatpush1.msra.mxu0 0.0
        %1253 = vmatprep.subr.mxu0 0.0
        %1254 = vmatpush1.msra.mxu0 0.0
        %1255 = vmatprep.subr.mxu0 0.0
        %1256 = vmatpush1.msra.mxu0 0.0
        %1257 = vmatprep.subr.mxu0 0.0
        %1258 = vmatpush1.msra.mxu0 0.0
        %1259 = vmatprep.subr.mxu0 0.0
        %1260 = vmatpush1.msra.mxu0 0.0
        %1261 = vmatprep.subr.mxu0 0.0
        %1262 = vmatpush1.msra.mxu0 0.0
        %1263 = vmatprep.subr.mxu0 0.0
        %1264 = vmatpush1.msra.mxu0 0.0
        %1265 = vmatprep.subr.mxu0 0.0
        %1266 = vmatpush1.msra.mxu0 0.0
        %1267 = vmatprep.subr.mxu0 0.0
        %1268 = vmatpush1.msra.mxu0 0.0
        %1269 = vmatprep.subr.mxu0 0.0
        %1270 = vmatpush1.msra.mxu0 0.0
        %1271 = vmatprep.subr.mxu0 0.0
        %1272 = vmatpush1.msra.mxu0 0.0
        %1273 = vmatprep.subr.mxu0 0.0
        %1274 = vmatpush1.msra.mxu0 0.0
        %1275 = vmatprep.subr.mxu0 0.0
        %1276 = vmatpush1.msra.mxu0 0.0
        %1277 = vmatprep.mubr.f32.mxu0 0.0
        %1278 = vmatmul.mubr.f32.gmra.mrb[0].mxu0 %v1208
        %v1279 = vpop.f32.mrb[0].mxu0
        %v1280 = vadd.f32 0.0, %v1279
        %v1281 = vpop.f32.mrb[0].mxu0
        %1282 = vmatprep.mubr.f32.mxu0 0.0
        %1283 = vmatmul.mubr.f32.gmra.mrb[0].mxu0 %v1211
        %v1284 = vpop.f32.mrb[0].mxu0
        %v1285 = vadd.f32 0.0, %v1284
        %v1286 = vpop.f32.mrb[0].mxu0
        %1287 = vdwg.mxu0
        %v1288 = vmul.f32 %v666, %v1280
        %v1289 = vmul.f32 %v671, %v1285
        %1290 = vmatprep.subr.mxu0 0.0
        %1291 = vmatpush1.msra.mxu0 %v1159
        %1292 = vmatprep.subr.mxu0 0.0
        %1293 = vmatpush1.msra.mxu0 %v1164
        %1294 = vmatprep.subr.mxu0 0.0
        %1295 = vmatpush1.msra.mxu0 0.0
        %1296 = vmatprep.subr.mxu0 0.0
        %1297 = vmatpush1.msra.mxu0 0.0
        %1298 = vmatprep.subr.mxu0 0.0
        %1299 = vmatpush1.msra.mxu0 0.0
        %1300 = vmatprep.subr.mxu0 0.0
        %1301 = vmatpush1.msra.mxu0 0.0
        %1302 = vmatprep.subr.mxu0 0.0
        %1303 = vmatpush1.msra.mxu0 0.0
        %1304 = vmatprep.subr.mxu0 0.0
        %1305 = vmatpush1.msra.mxu0 0.0
        %1306 = vmatprep.subr.mxu0 0.0
        %1307 = vmatpush1.msra.mxu0 0.0
        %1308 = vmatprep.subr.mxu0 0.0
        %1309 = vmatpush1.msra.mxu0 0.0
        %1310 = vmatprep.subr.mxu0 0.0
        %1311 = vmatpush1.msra.mxu0 0.0
        %1312 = vmatprep.subr.mxu0 0.0
        %1313 = vmatpush1.msra.mxu0 0.0
        %1314 = vmatprep.subr.mxu0 0.0
        %1315 = vmatpush1.msra.mxu0 0.0
        %1316 = vmatprep.subr.mxu0 0.0
        %1317 = vmatpush1.msra.mxu0 0.0
        %1318 = vmatprep.subr.mxu0 0.0
        %1319 = vmatpush1.msra.mxu0 0.0
        %1320 = vmatprep.subr.mxu0 0.0
        %1321 = vmatpush1.msra.mxu0 0.0
        %1322 = vmatprep.subr.mxu0 0.0
        %1323 = vmatpush1.msra.mxu0 0.0
        %1324 = vmatprep.subr.mxu0 0.0
        %1325 = vmatpush1.msra.mxu0 0.0
        %1326 = vmatprep.subr.mxu0 0.0
        %1327 = vmatpush1.msra.mxu0 0.0
        %1328 = vmatprep.subr.mxu0 0.0
        %1329 = vmatpush1.msra.mxu0 0.0
        %1330 = vmatprep.subr.mxu0 0.0
        %1331 = vmatpush1.msra.mxu0 0.0
        %1332 = vmatprep.subr.mxu0 0.0
        %1333 = vmatpush1.msra.mxu0 0.0
        %1334 = vmatprep.subr.mxu0 0.0
        %1335 = vmatpush1.msra.mxu0 0.0
        %1336 = vmatprep.subr.mxu0 0.0
        %1337 = vmatpush1.msra.mxu0 0.0
        %1338 = vmatprep.subr.mxu0 0.0
        %1339 = vmatpush1.msra.mxu0 0.0
        %1340 = vmatprep.subr.mxu0 0.0
        %1341 = vmatpush1.msra.mxu0 0.0
        %1342 = vmatprep.subr.mxu0 0.0
        %1343 = vmatpush1.msra.mxu0 0.0
        %1344 = vmatprep.subr.mxu0 0.0
        %1345 = vmatpush1.msra.mxu0 0.0
        %1346 = vmatprep.subr.mxu0 0.0
        %1347 = vmatpush1.msra.mxu0 0.0
        %1348 = vmatprep.subr.mxu0 0.0
        %1349 = vmatpush1.msra.mxu0 0.0
        %1350 = vmatprep.subr.mxu0 0.0
        %1351 = vmatpush1.msra.mxu0 0.0
        %1352 = vmatprep.subr.mxu0 0.0
        %1353 = vmatpush1.msra.mxu0 0.0
        %1354 = vmatprep.mubr.f32.mxu0 0.0
        %1355 = vmatmul.mubr.f32.gmra.mrb[0].mxu0 %v1208
        %v1356 = vpop.f32.mrb[0].mxu0
        %v1357 = vadd.f32 0.0, %v1356
        %v1358 = vpop.f32.mrb[0].mxu0
        %1359 = vmatprep.mubr.f32.mxu0 0.0
        %1360 = vmatmul.mubr.f32.gmra.mrb[0].mxu0 %v1211
        %v1361 = vpop.f32.mrb[0].mxu0
        %v1362 = vadd.f32 0.0, %v1361
        %v1363 = vpop.f32.mrb[0].mxu0
        %1364 = vdwg.mxu0
        %v1365 = vmul.f32 %v741, %v1357
        %v1366 = vmul.f32 %v746, %v1362
        %1367 = vmatprep.subr.mxu0 0.0
        %1368 = vmatpush1.msra.mxu0 %v1169
        %1369 = vmatprep.subr.mxu0 0.0
        %1370 = vmatpush1.msra.mxu0 %v1174
        %1371 = vmatprep.subr.mxu0 0.0
        %1372 = vmatpush1.msra.mxu0 0.0
        %1373 = vmatprep.subr.mxu0 0.0
        %1374 = vmatpush1.msra.mxu0 0.0
        %1375 = vmatprep.subr.mxu0 0.0
        %1376 = vmatpush1.msra.mxu0 0.0
        %1377 = vmatprep.subr.mxu0 0.0
        %1378 = vmatpush1.msra.mxu0 0.0
        %1379 = vmatprep.subr.mxu0 0.0
        %1380 = vmatpush1.msra.mxu0 0.0
        %1381 = vmatprep.subr.mxu0 0.0
        %1382 = vmatpush1.msra.mxu0 0.0
        %1383 = vmatprep.subr.mxu0 0.0
        %1384 = vmatpush1.msra.mxu0 0.0
        %1385 = vmatprep.subr.mxu0 0.0
        %1386 = vmatpush1.msra.mxu0 0.0
        %1387 = vmatprep.subr.mxu0 0.0
        %1388 = vmatpush1.msra.mxu0 0.0
        %1389 = vmatprep.subr.mxu0 0.0
        %1390 = vmatpush1.msra.mxu0 0.0
        %1391 = vmatprep.subr.mxu0 0.0
        %1392 = vmatpush1.msra.mxu0 0.0
        %1393 = vmatprep.subr.mxu0 0.0
        %1394 = vmatpush1.msra.mxu0 0.0
        %1395 = vmatprep.subr.mxu0 0.0
        %1396 = vmatpush1.msra.mxu0 0.0
        %1397 = vmatprep.subr.mxu0 0.0
        %1398 = vmatpush1.msra.mxu0 0.0
        %1399 = vmatprep.subr.mxu0 0.0
        %1400 = vmatpush1.msra.mxu0 0.0
        %1401 = vmatprep.subr.mxu0 0.0
        %1402 = vmatpush1.msra.mxu0 0.0
        %1403 = vmatprep.subr.mxu0 0.0
        %1404 = vmatpush1.msra.mxu0 0.0
        %1405 = vmatprep.subr.mxu0 0.0
        %1406 = vmatpush1.msra.mxu0 0.0
        %1407 = vmatprep.subr.mxu0 0.0
        %1408 = vmatpush1.msra.mxu0 0.0
        %1409 = vmatprep.subr.mxu0 0.0
        %1410 = vmatpush1.msra.mxu0 0.0
        %1411 = vmatprep.subr.mxu0 0.0
        %1412 = vmatpush1.msra.mxu0 0.0
        %1413 = vmatprep.subr.mxu0 0.0
        %1414 = vmatpush1.msra.mxu0 0.0
        %1415 = vmatprep.subr.mxu0 0.0
        %1416 = vmatpush1.msra.mxu0 0.0
        %1417 = vmatprep.subr.mxu0 0.0
        %1418 = vmatpush1.msra.mxu0 0.0
        %1419 = vmatprep.subr.mxu0 0.0
        %1420 = vmatpush1.msra.mxu0 0.0
        %1421 = vmatprep.subr.mxu0 0.0
        %1422 = vmatpush1.msra.mxu0 0.0
        %1423 = vmatprep.subr.mxu0 0.0
        %1424 = vmatpush1.msra.mxu0 0.0
        %1425 = vmatprep.subr.mxu0 0.0
        %1426 = vmatpush1.msra.mxu0 0.0
        %1427 = vmatprep.subr.mxu0 0.0
        %1428 = vmatpush1.msra.mxu0 0.0
        %1429 = vmatprep.subr.mxu0 0.0
        %1430 = vmatpush1.msra.mxu0 0.0
        %1431 = vmatprep.mubr.f32.mxu0 0.0
        %1432 = vmatmul.mubr.f32.gmra.mrb[0].mxu0 %v1208
        %v1433 = vpop.f32.mrb[0].mxu0
        %v1434 = vadd.f32 0.0, %v1433
        %v1435 = vpop.f32.mrb[0].mxu0
        %1436 = vmatprep.mubr.f32.mxu0 0.0
        %1437 = vmatmul.mubr.f32.gmra.mrb[0].mxu0 %v1211
        %v1438 = vpop.f32.mrb[0].mxu0
        %v1439 = vadd.f32 0.0, %v1438
        %v1440 = vpop.f32.mrb[0].mxu0
        %1441 = vdwg.mxu0
        %v1442 = vmul.f32 %v816, %v1434
        %v1443 = vmul.f32 %v821, %v1439
        %1444 = vmatprep.subr.mxu0 0.0
        %1445 = vmatpush1.msra.mxu0 %v1179
        %1446 = vmatprep.subr.mxu0 0.0
        %1447 = vmatpush1.msra.mxu0 %v1184
        %1448 = vmatprep.subr.mxu0 0.0
        %1449 = vmatpush1.msra.mxu0 0.0
        %1450 = vmatprep.subr.mxu0 0.0
        %1451 = vmatpush1.msra.mxu0 0.0
        %1452 = vmatprep.subr.mxu0 0.0
        %1453 = vmatpush1.msra.mxu0 0.0
        %1454 = vmatprep.subr.mxu0 0.0
        %1455 = vmatpush1.msra.mxu0 0.0
        %1456 = vmatprep.subr.mxu0 0.0
        %1457 = vmatpush1.msra.mxu0 0.0
        %1458 = vmatprep.subr.mxu0 0.0
        %1459 = vmatpush1.msra.mxu0 0.0
        %1460 = vmatprep.subr.mxu0 0.0
        %1461 = vmatpush1.msra.mxu0 0.0
        %1462 = vmatprep.subr.mxu0 0.0
        %1463 = vmatpush1.msra.mxu0 0.0
        %1464 = vmatprep.subr.mxu0 0.0
        %1465 = vmatpush1.msra.mxu0 0.0
        %1466 = vmatprep.subr.mxu0 0.0
        %1467 = vmatpush1.msra.mxu0 0.0
        %1468 = vmatprep.subr.mxu0 0.0
        %1469 = vmatpush1.msra.mxu0 0.0
        %1470 = vmatprep.subr.mxu0 0.0
        %1471 = vmatpush1.msra.mxu0 0.0
        %1472 = vmatprep.subr.mxu0 0.0
        %1473 = vmatpush1.msra.mxu0 0.0
        %1474 = vmatprep.subr.mxu0 0.0
        %1475 = vmatpush1.msra.mxu0 0.0
        %1476 = vmatprep.subr.mxu0 0.0
        %1477 = vmatpush1.msra.mxu0 0.0
        %1478 = vmatprep.subr.mxu0 0.0
        %1479 = vmatpush1.msra.mxu0 0.0
        %1480 = vmatprep.subr.mxu0 0.0
        %1481 = vmatpush1.msra.mxu0 0.0
        %1482 = vmatprep.subr.mxu0 0.0
        %1483 = vmatpush1.msra.mxu0 0.0
        %1484 = vmatprep.subr.mxu0 0.0
        %1485 = vmatpush1.msra.mxu0 0.0
        %1486 = vmatprep.subr.mxu0 0.0
        %1487 = vmatpush1.msra.mxu0 0.0
        %1488 = vmatprep.subr.mxu0 0.0
        %1489 = vmatpush1.msra.mxu0 0.0
        %1490 = vmatprep.subr.mxu0 0.0
        %1491 = vmatpush1.msra.mxu0 0.0
        %1492 = vmatprep.subr.mxu0 0.0
        %1493 = vmatpush1.msra.mxu0 0.0
        %1494 = vmatprep.subr.mxu0 0.0
        %1495 = vmatpush1.msra.mxu0 0.0
        %1496 = vmatprep.subr.mxu0 0.0
        %1497 = vmatpush1.msra.mxu0 0.0
        %1498 = vmatprep.subr.mxu0 0.0
        %1499 = vmatpush1.msra.mxu0 0.0
        %1500 = vmatprep.subr.mxu0 0.0
        %1501 = vmatpush1.msra.mxu0 0.0
        %1502 = vmatprep.subr.mxu0 0.0
        %1503 = vmatpush1.msra.mxu0 0.0
        %1504 = vmatprep.subr.mxu0 0.0
        %1505 = vmatpush1.msra.mxu0 0.0
        %1506 = vmatprep.subr.mxu0 0.0
        %1507 = vmatpush1.msra.mxu0 0.0
        %1508 = vmatprep.mubr.f32.mxu0 0.0
        %1509 = vmatmul.mubr.f32.gmra.mrb[0].mxu0 %v1208
        %v1510 = vpop.f32.mrb[0].mxu0
        %v1511 = vadd.f32 0.0, %v1510
        %v1512 = vpop.f32.mrb[0].mxu0
        %1513 = vmatprep.mubr.f32.mxu0 0.0
        %1514 = vmatmul.mubr.f32.gmra.mrb[0].mxu0 %v1211
        %v1515 = vpop.f32.mrb[0].mxu0
        %v1516 = vadd.f32 0.0, %v1515
        %v1517 = vpop.f32.mrb[0].mxu0
        %1518 = vdwg.mxu0
        %v1519 = vmul.f32 %v891, %v1511
        %v1520 = vmul.f32 %v896, %v1516
        %1521 = vmatprep.subr.mxu0 0.0
        %1522 = vmatpush1.msra.mxu0 %v1189
        %1523 = vmatprep.subr.mxu0 0.0
        %1524 = vmatpush1.msra.mxu0 %v1194
        %1525 = vmatprep.subr.mxu0 0.0
        %1526 = vmatpush1.msra.mxu0 0.0
        %1527 = vmatprep.subr.mxu0 0.0
        %1528 = vmatpush1.msra.mxu0 0.0
        %1529 = vmatprep.subr.mxu0 0.0
        %1530 = vmatpush1.msra.mxu0 0.0
        %1531 = vmatprep.subr.mxu0 0.0
        %1532 = vmatpush1.msra.mxu0 0.0
        %1533 = vmatprep.subr.mxu0 0.0
        %1534 = vmatpush1.msra.mxu0 0.0
        %1535 = vmatprep.subr.mxu0 0.0
        %1536 = vmatpush1.msra.mxu0 0.0
        %1537 = vmatprep.subr.mxu0 0.0
        %1538 = vmatpush1.msra.mxu0 0.0
        %1539 = vmatprep.subr.mxu0 0.0
        %1540 = vmatpush1.msra.mxu0 0.0
        %1541 = vmatprep.subr.mxu0 0.0
        %1542 = vmatpush1.msra.mxu0 0.0
        %1543 = vmatprep.subr.mxu0 0.0
        %1544 = vmatpush1.msra.mxu0 0.0
        %1545 = vmatprep.subr.mxu0 0.0
        %1546 = vmatpush1.msra.mxu0 0.0
        %1547 = vmatprep.subr.mxu0 0.0
        %1548 = vmatpush1.msra.mxu0 0.0
        %1549 = vmatprep.subr.mxu0 0.0
        %1550 = vmatpush1.msra.mxu0 0.0
        %1551 = vmatprep.subr.mxu0 0.0
        %1552 = vmatpush1.msra.mxu0 0.0
        %1553 = vmatprep.subr.mxu0 0.0
        %1554 = vmatpush1.msra.mxu0 0.0
        %1555 = vmatprep.subr.mxu0 0.0
        %1556 = vmatpush1.msra.mxu0 0.0
        %1557 = vmatprep.subr.mxu0 0.0
        %1558 = vmatpush1.msra.mxu0 0.0
        %1559 = vmatprep.subr.mxu0 0.0
        %1560 = vmatpush1.msra.mxu0 0.0
        %1561 = vmatprep.subr.mxu0 0.0
        %1562 = vmatpush1.msra.mxu0 0.0
        %1563 = vmatprep.subr.mxu0 0.0
        %1564 = vmatpush1.msra.mxu0 0.0
        %1565 = vmatprep.subr.mxu0 0.0
        %1566 = vmatpush1.msra.mxu0 0.0
        %1567 = vmatprep.subr.mxu0 0.0
        %1568 = vmatpush1.msra.mxu0 0.0
        %1569 = vmatprep.subr.mxu0 0.0
        %1570 = vmatpush1.msra.mxu0 0.0
        %1571 = vmatprep.subr.mxu0 0.0
        %1572 = vmatpush1.msra.mxu0 0.0
        %1573 = vmatprep.subr.mxu0 0.0
        %1574 = vmatpush1.msra.mxu0 0.0
        %1575 = vmatprep.subr.mxu0 0.0
        %1576 = vmatpush1.msra.mxu0 0.0
        %1577 = vmatprep.subr.mxu0 0.0
        %1578 = vmatpush1.msra.mxu0 0.0
        %1579 = vmatprep.subr.mxu0 0.0
        %1580 = vmatpush1.msra.mxu0 0.0
        %1581 = vmatprep.subr.mxu0 0.0
        %1582 = vmatpush1.msra.mxu0 0.0
        %1583 = vmatprep.subr.mxu0 0.0
        %1584 = vmatpush1.msra.mxu0 0.0
        %1585 = vmatprep.mubr.f32.mxu0 0.0
        %1586 = vmatmul.mubr.f32.gmra.mrb[0].mxu0 %v1208
        %v1587 = vpop.f32.mrb[0].mxu0
        %v1588 = vadd.f32 0.0, %v1587
        %v1589 = vpop.f32.mrb[0].mxu0
        %1590 = vmatprep.mubr.f32.mxu0 0.0
        %1591 = vmatmul.mubr.f32.gmra.mrb[0].mxu0 %v1211
        %v1592 = vpop.f32.mrb[0].mxu0
        %v1593 = vadd.f32 0.0, %v1592
        %v1594 = vpop.f32.mrb[0].mxu0
        %1595 = vdwg.mxu0
        %v1596 = vmul.f32 %v966, %v1588
        %v1597 = vmul.f32 %v971, %v1593
        %1598 = vmatprep.subr.mxu0 0.0
        %1599 = vmatpush1.msra.mxu0 %v1199
        %1600 = vmatprep.subr.mxu0 0.0
        %1601 = vmatpush1.msra.mxu0 %v1204
        %1602 = vmatprep.subr.mxu0 0.0
        %1603 = vmatpush1.msra.mxu0 0.0
        %1604 = vmatprep.subr.mxu0 0.0
        %1605 = vmatpush1.msra.mxu0 0.0
        %1606 = vmatprep.subr.mxu0 0.0
        %1607 = vmatpush1.msra.mxu0 0.0
        %1608 = vmatprep.subr.mxu0 0.0
        %1609 = vmatpush1.msra.mxu0 0.0
        %1610 = vmatprep.subr.mxu0 0.0
        %1611 = vmatpush1.msra.mxu0 0.0
        %1612 = vmatprep.subr.mxu0 0.0
        %1613 = vmatpush1.msra.mxu0 0.0
        %1614 = vmatprep.subr.mxu0 0.0
        %1615 = vmatpush1.msra.mxu0 0.0
        %1616 = vmatprep.subr.mxu0 0.0
        %1617 = vmatpush1.msra.mxu0 0.0
        %1618 = vmatprep.subr.mxu0 0.0
        %1619 = vmatpush1.msra.mxu0 0.0
        %1620 = vmatprep.subr.mxu0 0.0
        %1621 = vmatpush1.msra.mxu0 0.0
        %1622 = vmatprep.subr.mxu0 0.0
        %1623 = vmatpush1.msra.mxu0 0.0
        %1624 = vmatprep.subr.mxu0 0.0
        %1625 = vmatpush1.msra.mxu0 0.0
        %1626 = vmatprep.subr.mxu0 0.0
        %1627 = vmatpush1.msra.mxu0 0.0
        %1628 = vmatprep.subr.mxu0 0.0
        %1629 = vmatpush1.msra.mxu0 0.0
        %1630 = vmatprep.subr.mxu0 0.0
        %1631 = vmatpush1.msra.mxu0 0.0
        %1632 = vmatprep.subr.mxu0 0.0
        %1633 = vmatpush1.msra.mxu0 0.0
        %1634 = vmatprep.subr.mxu0 0.0
        %1635 = vmatpush1.msra.mxu0 0.0
        %1636 = vmatprep.subr.mxu0 0.0
        %1637 = vmatpush1.msra.mxu0 0.0
        %1638 = vmatprep.subr.mxu0 0.0
        %1639 = vmatpush1.msra.mxu0 0.0
        %1640 = vmatprep.subr.mxu0 0.0
        %1641 = vmatpush1.msra.mxu0 0.0
        %1642 = vmatprep.subr.mxu0 0.0
        %1643 = vmatpush1.msra.mxu0 0.0
        %1644 = vmatprep.subr.mxu0 0.0
        %1645 = vmatpush1.msra.mxu0 0.0
        %1646 = vmatprep.subr.mxu0 0.0
        %1647 = vmatpush1.msra.mxu0 0.0
        %1648 = vmatprep.subr.mxu0 0.0
        %1649 = vmatpush1.msra.mxu0 0.0
        %1650 = vmatprep.subr.mxu0 0.0
        %1651 = vmatpush1.msra.mxu0 0.0
        %1652 = vmatprep.subr.mxu0 0.0
        %1653 = vmatpush1.msra.mxu0 0.0
        %1654 = vmatprep.subr.mxu0 0.0
        %1655 = vmatpush1.msra.mxu0 0.0
        %1656 = vmatprep.subr.mxu0 0.0
        %1657 = vmatpush1.msra.mxu0 0.0
        %1658 = vmatprep.subr.mxu0 0.0
        %1659 = vmatpush1.msra.mxu0 0.0
        %1660 = vmatprep.subr.mxu0 0.0
        %1661 = vmatpush1.msra.mxu0 0.0
        %1662 = vmatprep.mubr.f32.mxu0 0.0
        %1663 = vmatmul.mubr.f32.gmra.mrb[0].mxu0 %v1208
        %v1664 = vpop.f32.mrb[0].mxu0
        %v1665 = vadd.f32 0.0, %v1664
        %v1666 = vpop.f32.mrb[0].mxu0
        %1667 = vmatprep.mubr.f32.mxu0 0.0
        %1668 = vmatmul.mubr.f32.gmra.mrb[0].mxu0 %v1211
        %v1669 = vpop.f32.mrb[0].mxu0
        %v1670 = vadd.f32 0.0, %v1669
        %v1671 = vpop.f32.mrb[0].mxu0
        %1672 = vdwg.mxu0
        %v1673 = vmul.f32 %v1041, %v1665
        %v1674 = vmul.f32 %v1046, %v1670
        %v1675 = vadd.f32 %v1288, %v1519
        %v1676 = vadd.f32 %v1289, %v1520
        %v1677 = vmul.f32 %v1675, 0.5
        %v1678 = vmul.f32 %v1676, 0.5
        %1679 = vst [vmem:[%s431] sm:$0xff] %v1677
        %1680 = vst [vmem:[%s431 + $0x8] sm:$0xff] %v1678
        %v1681 = vadd.f32 %v1365, %v1596
        %v1682 = vadd.f32 %v1366, %v1597
        %v1683 = vmul.f32 %v1681, 0.5
        %v1684 = vmul.f32 %v1682, 0.5
        %s1685 = scalar_lea.vmem %s431, 16 [#allocation4]
        %1686 = vst [vmem:[%s1685] sm:$0xff] %v1683
        %1687 = vst [vmem:[%s1685 + $0x8] sm:$0xff] %v1684
        %v1688 = vadd.f32 %v1442, %v1673
        %v1689 = vadd.f32 %v1443, %v1674
        %v1690 = vmul.f32 %v1688, 0.5
        %v1691 = vmul.f32 %v1689, 0.5
        %s1692 = scalar_lea.vmem %s431, 32 [#allocation4]
        %1693 = vst [vmem:[%s1692] sm:$0xff] %v1690
        %1694 = vst [vmem:[%s1692 + $0x8] sm:$0xff] %v1691
        %s1695 = sand.u32 %s121, 1
        %s1696 = scalar_lea.sflag [#allocation5], %s1695
        %s1697 = sand.u32 %s121, 1
        %s1698 = smul.addr %s1697, 48
        %s1699 = scalar_lea.vmem [#allocation4], %s1698
        // Predicated region
        $region109: #{multilayer_forward.1} parent=99 // pred_check
          %p1700 = pneg %p131
        $region110: #{multilayer_forward.1} parent=99 // pred_check_branch
          %1702 = sbr.rel (%p1700) target = $region112
        $region111: #{multilayer_forward.1} parent=99 // pred_region
          %s1704 = ssub.s32 768, 768
          %1705 = vsyncadd %s1696, %s1704
          %s1706 = smul.addr %s22, 6
          %s1707 = smul.addr %s21, 54
          %s1708 = sadd.s32 %s1706, %s1707
          %s1709 = smul.addr %s1708, 128
          %s1710 = scalar_lea.hbm %s3, %s1709
          %s1711 = sshll.u32 %s1699, 4
          %s1712 = int_to_ptr.vmem [resolvable:$true] %s1711
          %1717 = dma.vmem_to_hbm [thread:$0]  %s1712, 768, %s1710, %s1696, 128, 128, 8
        $region112: #{multilayer_forward.1} parent=99 // pred_fallthru
          _
      $region100: #{multilayer_forward.1} parent=5 // pred_fallthru
        _
      %p1718 = scmp.le.s32.totalorder 2, %s12
      // Predicated region
      $region113: #{multilayer_forward.1} parent=5 // pred_check
        %p1719 = pneg %p1718
      $region114: #{multilayer_forward.1} parent=5 // pred_check_branch
        %1721 = sbr.rel (%p1719) target = $region116
      $region115: #{multilayer_forward.1} parent=5 // pred_region
        %s1722 = ssub.s32 %s12, 2
        // Predicated region
        $region117: #{multilayer_forward.1} parent=115 // pred_check
          %p1723 = pneg %p137
        $region118: #{multilayer_forward.1} parent=115 // pred_check_branch
          %1725 = sbr.rel (%p1723) target = $region120
        $region119: #{multilayer_forward.1} parent=115 // pred_region
          %s1726 = sand.u32 %s122, 1
          %s1727 = scalar_lea.sflag [#allocation5], %s1726
          %s1728 = sand.u32 %s122, 1
          %s1729 = smul.addr %s1728, 48
          %s1730 = scalar_lea.vmem [#allocation4], %s1729
          %1731 = dma.done %s1727, 768
        $region120: #{multilayer_forward.1} parent=115 // pred_fallthru
          _
      $region116: #{multilayer_forward.1} parent=5 // pred_fallthru
        _
    $region6: #{multilayer_forward.1} parent=1 // loop_footer
      %s16 = sadd.s32 1, %s12
    $region7: #{multilayer_forward.1} parent=1 // loop_footer_branch
      %11 = sbr.rel target = $region3
    $region8: #{multilayer_forward.1} parent=1 // loop_exit
      _
    %1732 = vsyncpa [#allocation5], 1
    %s1733 = scalar_lea.sflag [#allocation5], 1
    %1734 = vsyncpa %s1733, 1

</llo_original>
